<compile_context>
chip_gen: v6e
topology: v6e:2x2x1
jax: 0.10.0
libtpu: 0.0.40
codegen_flags: <defaults>
</compile_context>

<pallas_src>
import functools

import jax
import jax.numpy as jnp
from jax import lax
from jax.experimental import pallas as pl
from jax.experimental.pallas import tpu as pltpu


def _round_up(x, m):
    return (x + m - 1) // m * m


def _largest_divisor_le(n, limit):
    limit = max(1, min(n, limit))
    for d in range(limit, 0, -1):
        if n % d == 0:
            return d
    return 1


# ----------------------------------------------------------------------------
# Kernel A: conv as ONE K-packed MXU dot per (image, L-chunk) + per-chunk
# channel sum / sum-of-squares.  No scratch, no accumulator RMW.
#   p_ref : (1, Lt, Kcp)  bf16 im2col rows (row q = oh*OWc + ow)
#   w_ref : (Kcp, Cp)     bf16 packed weights
#   m_ref : (Lt, 1)       f32  {0,1} gutter mask (ow < OW), identical per chunk
# ----------------------------------------------------------------------------
def conv_stats_kernel(p_ref, w_ref, m_ref, y_ref, s1_ref, s2_ref):
    acc = jnp.dot(p_ref[0], w_ref[...], preferred_element_type=jnp.float32)
    y_ref[0] = acc.astype(y_ref.dtype)
    am = acc * m_ref[...]                                  # gutter cols -> 0
    s1_ref[0, 0] = jnp.sum(am, axis=0, keepdims=True)
    s2_ref[0, 0] = jnp.sum(am * acc, axis=0, keepdims=True)


# ----------------------------------------------------------------------------
# Kernel B: fused BatchNorm (affine) + ReLU + 2x2 max-pool.
# y block: (1, 2*thp, Wq, 2*Cp); the last dim packs the (even-W | odd-W) channel
# pair, adjacent conv rows are the two H taps of each pooling window.
# ----------------------------------------------------------------------------
def bn_relu_pool_kernel(y_ref, ss_ref, o_ref, *, thp, Wq, Cp):
    sc = ss_ref[0:1, :]                                    # (1, Cp) f32
    sh = ss_ref[1:2, :]
    yb = y_ref[0].reshape(thp, 2, Wq, 2 * Cp)              # free major-dim split

    def bn(v):                                             # (thp, Wq, Cp) bf16
        return jnp.maximum(v.astype(jnp.float32) * sc + sh, 0.0)

    m = jnp.maximum(
        jnp.maximum(bn(yb[:, 0, :, :Cp]), bn(yb[:, 0, :, Cp:])),
        jnp.maximum(bn(yb[:, 1, :, :Cp]), bn(yb[:, 1, :, Cp:])))
    o_ref[0] = m


# Kernel B' (downsample=False): fused BatchNorm + ReLU only, vectorized block.
def bn_relu_kernel(y_ref, ss_ref, o_ref):
    sc = ss_ref[0:1, :]
    sh = ss_ref[1:2, :]
    v = y_ref[0].astype(jnp.float32)                       # (th, OWc, Cp)
    o_ref[0] = jnp.maximum(v * sc + sh, 0.0)


@functools.partial(jax.jit, static_argnames=("stride", "padding", "downsample"))
def conv_layer_forward(x, weight, gamma, beta, *, stride=1, padding=-1,
                       downsample=True, eps=1e-5):
    """ConvLayer forward. x is NCHW float32, output is NCHW float32."""
    Cout, Cin, KH, KW = weight.shape
    if padding == -1:
        padding = (KH - 1) // 2
    N, C, H, W = x.shape
    assert C == Cin
    s = stride
    p = padding

    OH = (H + 2 * p - KH) // s + 1
    OW = (W + 2 * p - KW) // s + 1
    OWc = _round_up(max(OW, 2), 8)        # even, 8-aligned padded output width
    Cp = _round_up(Cout, 128)             # lane-dense conv-output channels
    Kc = KH * KW * Cin                    # packed contraction dim
    Kcp = _round_up(Kc, 8)
    Lp = OH * OWc                         # compact output rows (q = oh*OWc + ow)

    # ---- wrapper-side K-packed im2col (bf16): one MXU dot per tile ----------
    # TODO(synk): for large Cin (>=128) the KH*KW duplication of x in HBM
    # outweighs the MXU K-util win; switch to per-tap slices with halo'd DMA.
    x_nhwc = jnp.transpose(x, (0, 2, 3, 1)).astype(jnp.bfloat16)
    Hneed = (OH - 1) * s + KH
    Wneed = (OWc - 1) * s + KW
    xp = jnp.pad(x_nhwc, ((0, 0),
                          (p, max(Hneed - p - H, 0)),
                          (p, max(Wneed - p - W, 0)),
                          (0, 0)))
    taps = []
    for kh in range(KH):
        for kw in range(KW):
            taps.append(xp[:, kh:kh + (OH - 1) * s + 1:s,
                           kw:kw + (OWc - 1) * s + 1:s, :])
    patches = jnp.concatenate(taps, axis=-1)              # (N, OH, OWc, Kc)
    patches = jnp.pad(patches, ((0, 0), (0, 0), (0, 0), (0, Kcp - Kc)))
    patches = patches.reshape(N, Lp, Kcp)

    # torch weight (Cout, Cin, KH, KW) -> (Kcp, Cp) bf16, zero-padded.
    wt = jnp.transpose(weight, (2, 3, 1, 0)).reshape(Kc, Cout)
    wt = jnp.pad(wt, ((0, Kcp - Kc), (0, Cp - Cout))).astype(jnp.bfloat16)

    # L-chunk tile: whole output rows, a few MiB per block (fits v7x VMEM with
    # double-buffering, gives extra "parallel" grid steps beyond the batch dim).
    bytes_per_row = 4 * Kcp + 16 * Cp
    max_rows = max(OWc, (3 * 1024 * 1024) // bytes_per_row)
    t_oh = _largest_divisor_le(OH, max(1, max_rows // OWc))
    Lt = t_oh * OWc
    nL = OH // t_oh

    # Hoisted (Lt, 1) gutter mask (ow < OW); identical for every chunk.
    mask = (jnp.arange(Lt) % OWc < OW).astype(jnp.float32).reshape(Lt, 1)

    flops = int(2 * N * Lp * Kcp * Cp)
    bytes_acc = int(patches.size * 2 + wt.size * 2 + N * Lp * Cp * 2
                    + 2 * N * nL * Cp * 4)
    y, ps1, ps2 = pl.pallas_call(
        conv_stats_kernel,
        grid=(N, nL),
        in_specs=[pl.BlockSpec((1, Lt, Kcp), lambda n, l: (n, l, 0)),
                  pl.BlockSpec((Kcp, Cp), lambda n, l: (0, 0)),
                  pl.BlockSpec((Lt, 1), lambda n, l: (0, 0))],
        out_specs=[pl.BlockSpec((1, Lt, Cp), lambda n, l: (n, l, 0)),
                   pl.BlockSpec((1, 1, 1, Cp), lambda n, l: (n, l, 0, 0)),
                   pl.BlockSpec((1, 1, 1, Cp), lambda n, l: (n, l, 0, 0))],
        out_shape=[jax.ShapeDtypeStruct((N, Lp, Cp), jnp.bfloat16),
                   jax.ShapeDtypeStruct((N, nL, 1, Cp), jnp.float32),
                   jax.ShapeDtypeStruct((N, nL, 1, Cp), jnp.float32)],
        compiler_params=pltpu.CompilerParams(
            dimension_semantics=("parallel", "parallel"),
            vmem_limit_bytes=48 * 1024 * 1024),
        cost_estimate=pl.CostEstimate(flops=flops, transcendentals=0,
                                      bytes_accessed=bytes_acc),
    )(patches, wt, mask)

    # ---- training-mode BatchNorm statistics (f32, clamped biased variance) ---
    # TODO(synk): E[x^2]-E[x]^2 can cancel for channels with |mean| >> std;
    # switch to a two-pass / Welford reduction if that regime matters.
    Mtot = N * OH * OW
    s1 = jnp.sum(ps1, axis=(0, 1, 2))
    s2 = jnp.sum(ps2, axis=(0, 1, 2))
    mean = s1 / Mtot
    var = jnp.maximum(s2 / Mtot - mean * mean, 0.0)
    gp = jnp.pad(gamma.astype(jnp.float32), (0, Cp - Cout))
    bp = jnp.pad(beta.astype(jnp.float32), (0, Cp - Cout))
    scale = gp * lax.rsqrt(var + eps)
    shift = bp - mean * scale
    ss = jnp.stack([scale, shift], axis=0)                 # (2, Cp): one DMA

    cparams_b = pltpu.CompilerParams(
        dimension_semantics=("parallel", "parallel"),
        vmem_limit_bytes=48 * 1024 * 1024)

    if downsample:
        OHp, OWp = OH // 2, OW // 2                        # MaxPool2d(2,2), floor
        Wq = OWc // 2
        # free, order-preserving reshape: last dim packs the (even-W, odd-W) pair
        y4 = y.reshape(N, OH, Wq, 2 * Cp)
        max_thp = max(1, (4 * 1024 * 1024) // (40 * Wq * Cp))
        thp = _largest_divisor_le(OHp, max_thp)
        kern_b = functools.partial(bn_relu_pool_kernel, thp=thp, Wq=Wq, Cp=Cp)
        out = pl.pallas_call(
            kern_b,
            grid=(N, OHp // thp),
            in_specs=[pl.BlockSpec((1, 2 * thp, Wq, 2 * Cp),
                                   lambda n, j: (n, j, 0, 0)),
                      pl.BlockSpec((2, Cp), lambda n, j: (0, 0))],
            out_specs=pl.BlockSpec((1, thp, Wq, Cp), lambda n, j: (n, j, 0, 0)),
            out_shape=jax.ShapeDtypeStruct((N, OHp, Wq, Cp), jnp.float32),
            compiler_params=cparams_b,
        )(y4, ss)
        out = out[:, :, :OWp, :Cout]
    else:
        y3 = y.reshape(N, OH, OWc, Cp)
        max_th = max(1, (4 * 1024 * 1024) // (24 * OWc * Cp))
        th = _largest_divisor_le(OH, max_th)
        out = pl.pallas_call(
            bn_relu_kernel,
            grid=(N, OH // th),
            in_specs=[pl.BlockSpec((1, th, OWc, Cp), lambda n, j: (n, j, 0, 0)),
                      pl.BlockSpec((2, Cp), lambda n, j: (0, 0))],
            out_specs=pl.BlockSpec((1, th, OWc, Cp), lambda n, j: (n, j, 0, 0)),
            out_shape=jax.ShapeDtypeStruct((N, OH, OWc, Cp), jnp.float32),
            compiler_params=cparams_b,
        )(y3, ss)
        out = out[:, :, :OW, :Cout]

    # TODO(synk): emit NCHW / un-padded channels directly from kernel B to save
    # this wrapper slice+transpose pass on low-HBM-BW parts (v5e).
    return jnp.transpose(out, (0, 3, 1, 2))


# ----------------------------------------------------------------------------
# Pure-JAX reference (correctness check only).
# ----------------------------------------------------------------------------
def conv_layer_ref(x, weight, gamma, beta, *, stride=1, padding=-1,
                   downsample=True, eps=1e-5):
    KH = weight.shape[2]
    if padding == -1:
        padding = (KH - 1) // 2
    y = lax.conv_general_dilated(
        x, weight, (stride, stride), [(padding, padding)] * 2,
        dimension_numbers=("NCHW", "OIHW", "NCHW"))
    mean = y.mean(axis=(0, 2, 3), keepdims=True)
    var = y.var(axis=(0, 2, 3), keepdims=True)   # biased, BN training mode
    y = (y - mean) / jnp.sqrt(var + eps) * gamma.reshape(1, -1, 1, 1) \
        + beta.reshape(1, -1, 1, 1)
    y = jnp.maximum(y, 0.0)
    if downsample:
        y = lax.reduce_window(y, -jnp.inf, lax.max,
                              (1, 1, 2, 2), (1, 1, 2, 2), "VALID")
    return y


if __name__ == "__main__":
    # ConvLayer(in_channels=4, out_channels=8, kernel_size=3) on a 2x4x16x16 input.
    key = jax.random.PRNGKey(0)
    k_x, k_w = jax.random.split(key)
    N, Cin, H, W = 2, 4, 16, 16
    Cout, KS = 8, 3

    x = jax.random.normal(k_x, (N, Cin, H, W), dtype=jnp.float32)
    weight = 0.1 * jax.random.normal(k_w, (Cout, Cin, KS, KS), dtype=jnp.float32)
    gamma = jnp.ones((Cout,), dtype=jnp.float32)   # BatchNorm2d default weight
    beta = jnp.zeros((Cout,), dtype=jnp.float32)   # BatchNorm2d default bias

    # downsample=True path (Conv -> BN -> ReLU -> MaxPool2d(2,2))
    out = conv_layer_forward(x, weight, gamma, beta,
                             stride=1, padding=-1, downsample=True)
    out = jax.block_until_ready(out)
    ref = conv_layer_ref(x, weight, gamma, beta,
                         stride=1, padding=-1, downsample=True)
    assert out.shape == (N, Cout, H // 2, W // 2), out.shape
    err = float(jnp.max(jnp.abs(out - ref)))
    # bf16 MXU operands + bf16 y intermediate -> bf16-level tolerance.
    assert jnp.allclose(out, ref, rtol=5e-2, atol=5e-2), err

    # downsample=False path (Conv -> BN -> ReLU)
    out2 = conv_layer_forward(x, weight, gamma, beta,
                              stride=1, padding=-1, downsample=False)
    out2 = jax.block_until_ready(out2)
    ref2 = conv_layer_ref(x, weight, gamma, beta,
                          stride=1, padding=-1, downsample=False)
    assert out2.shape == (N, Cout, H, W), out2.shape
    err2 = float(jnp.max(jnp.abs(out2 - ref2)))
    assert jnp.allclose(out2, ref2, rtol=5e-2, atol=5e-2), err2

    print("KERNEL_OK")
</pallas_src>

<mosaic_0001>
module attributes {stable_mosaic.version = 11 : i64} {
  func.func @conv_stats_kernel(%arg0: i32, %arg1: i32, %arg2: memref<1x256x40xbf16, #tpu.memory_space<vmem>>, %arg3: memref<40x128xbf16, #tpu.memory_space<vmem>>, %arg4: memref<256x1xf32, #tpu.memory_space<vmem>>, %arg5: memref<1x256x128xbf16, #tpu.memory_space<vmem>>, %arg6: memref<1x1x1x128xf32, #tpu.memory_space<vmem>>, %arg7: memref<1x1x1x128xf32, #tpu.memory_space<vmem>>) attributes {dimension_semantics = [#tpu.dimension_semantics<parallel>, #tpu.dimension_semantics<parallel>], iteration_bounds = array<i64: 2, 1>, scalar_prefetch = 0 : i64, scratch_operands = 0 : i64, tpu.core_type = #tpu.core_type<tc>, window_params = [{transform_indices = @transform_0, window_bounds = array<i64: 1, 256, 40>}, {pipeline_mode = #tpu.pipeline_mode<synchronous>, transform_indices = @transform_1, window_bounds = array<i64: 40, 128>}, {pipeline_mode = #tpu.pipeline_mode<synchronous>, transform_indices = @transform_2, window_bounds = array<i64: 256, 1>}, {transform_indices = @transform_3, window_bounds = array<i64: 1, 256, 128>}, {transform_indices = @transform_4, window_bounds = array<i64: 1, 1, 1, 128>}, {transform_indices = @transform_5, window_bounds = array<i64: 1, 1, 1, 128>}]} {
    %c0 = arith.constant 0 : index
    %c0_0 = arith.constant 0 : index
    %c0_1 = arith.constant 0 : index
    %0 = vector.load %arg2[%c0, %c0_0, %c0_1] : memref<1x256x40xbf16, #tpu.memory_space<vmem>>, vector<1x256x40xbf16>
    %1 = vector.shape_cast %0 : vector<1x256x40xbf16> to vector<256x40xbf16>
    %c0_2 = arith.constant 0 : index
    %c0_3 = arith.constant 0 : index
    %2 = vector.load %arg3[%c0_2, %c0_3] : memref<40x128xbf16, #tpu.memory_space<vmem>>, vector<40x128xbf16>
    %cst = arith.constant dense<0.000000e+00> : vector<256x128xf32>
    %3 = tpu.matmul %1, %2, %cst {dimension_numbers = #tpu.dot_dimension_numbers<[1], [0], [0], [1], [0, 0, 1, 1], [], []>} : vector<256x40xbf16>, vector<40x128xbf16>, vector<256x128xf32> -> vector<256x128xf32>
    %4 = arith.truncf %3 : vector<256x128xf32> to vector<256x128xbf16>
    %c0_4 = arith.constant 0 : index
    %c0_5 = arith.constant 0 : index
    %c0_6 = arith.constant 0 : index
    %5 = vector.load %arg5[%c0_4, %c0_5, %c0_6] : memref<1x256x128xbf16, #tpu.memory_space<vmem>>, vector<1x256x128xbf16>
    %6 = vector.shape_cast %5 : vector<1x256x128xbf16> to vector<256x128xbf16>
    %7 = vector.shape_cast %4 : vector<256x128xbf16> to vector<1x256x128xbf16>
    tpu.vector_store %arg5[%c0_4, %c0_5, %c0_6], %7 {strides = array<i32>} : memref<1x256x128xbf16, #tpu.memory_space<vmem>>, vector<1x256x128xbf16>,
    %c0_7 = arith.constant 0 : index
    %c0_8 = arith.constant 0 : index
    %8 = vector.load %arg4[%c0_7, %c0_8] : memref<256x1xf32, #tpu.memory_space<vmem>>, vector<256x1xf32>
    %9 = vector.broadcast %8 : vector<256x1xf32> to vector<256x128xf32>
    %10 = arith.mulf %3, %9 : vector<256x128xf32>
    %cst_9 = arith.constant dense<0.000000e+00> : vector<128xf32>
    %11 = vector.multi_reduction <add>, %10, %cst_9 [0] : vector<256x128xf32> to vector<128xf32>
    %12 = vector.shape_cast %11 : vector<128xf32> to vector<1x128xf32>
    %c0_10 = arith.constant 0 : index
    %c0_11 = arith.constant 0 : index
    %c0_12 = arith.constant 0 : index
    %c0_13 = arith.constant 0 : index
    %13 = vector.load %arg6[%c0_10, %c0_11, %c0_12, %c0_13] : memref<1x1x1x128xf32, #tpu.memory_space<vmem>>, vector<1x1x1x128xf32>
    %14 = vector.shape_cast %13 : vector<1x1x1x128xf32> to vector<1x128xf32>
    %15 = vector.shape_cast %12 : vector<1x128xf32> to vector<1x1x1x128xf32>
    tpu.vector_store %arg6[%c0_10, %c0_11, %c0_12, %c0_13], %15 {strides = array<i32>} : memref<1x1x1x128xf32, #tpu.memory_space<vmem>>, vector<1x1x1x128xf32>,
    %16 = arith.mulf %10, %3 : vector<256x128xf32>
    %cst_14 = arith.constant dense<0.000000e+00> : vector<128xf32>
    %17 = vector.multi_reduction <add>, %16, %cst_14 [0] : vector<256x128xf32> to vector<128xf32>
    %18 = vector.shape_cast %17 : vector<128xf32> to vector<1x128xf32>
    %c0_15 = arith.constant 0 : index
    %c0_16 = arith.constant 0 : index
    %c0_17 = arith.constant 0 : index
    %c0_18 = arith.constant 0 : index
    %19 = vector.load %arg7[%c0_15, %c0_16, %c0_17, %c0_18] : memref<1x1x1x128xf32, #tpu.memory_space<vmem>>, vector<1x1x1x128xf32>
    %20 = vector.shape_cast %19 : vector<1x1x1x128xf32> to vector<1x128xf32>
    %21 = vector.shape_cast %18 : vector<1x128xf32> to vector<1x1x1x128xf32>
    tpu.vector_store %arg7[%c0_15, %c0_16, %c0_17, %c0_18], %21 {strides = array<i32>} : memref<1x1x1x128xf32, #tpu.memory_space<vmem>>, vector<1x1x1x128xf32>,
    return
  }
  func.func @transform_0(%arg0: i32, %arg1: i32) -> (i32, i32, i32) {
    %c0_i32 = arith.constant 0 : i32
    %c0_i32_0 = arith.constant 0 : i32
    return %arg0, %arg1, %c0_i32 : i32, i32, i32
  }
  func.func @transform_1(%arg0: i32, %arg1: i32) -> (i32, i32) {
    %c0_i32 = arith.constant 0 : i32
    %c0_i32_0 = arith.constant 0 : i32
    %c0_i32_1 = arith.constant 0 : i32
    return %c0_i32, %c0_i32_0 : i32, i32
  }
  func.func @transform_2(%arg0: i32, %arg1: i32) -> (i32, i32) {
    %c0_i32 = arith.constant 0 : i32
    %c0_i32_0 = arith.constant 0 : i32
    %c0_i32_1 = arith.constant 0 : i32
    return %c0_i32, %c0_i32_0 : i32, i32
  }
  func.func @transform_3(%arg0: i32, %arg1: i32) -> (i32, i32, i32) {
    %c0_i32 = arith.constant 0 : i32
    %c0_i32_0 = arith.constant 0 : i32
    return %arg0, %arg1, %c0_i32 : i32, i32, i32
  }
  func.func @transform_4(%arg0: i32, %arg1: i32) -> (i32, i32, i32, i32) {
    %c0_i32 = arith.constant 0 : i32
    %c0_i32_0 = arith.constant 0 : i32
    %c0_i32_1 = arith.constant 0 : i32
    return %arg0, %arg1, %c0_i32, %c0_i32_0 : i32, i32, i32, i32
  }
  func.func @transform_5(%arg0: i32, %arg1: i32) -> (i32, i32, i32, i32) {
    %c0_i32 = arith.constant 0 : i32
    %c0_i32_0 = arith.constant 0 : i32
    %c0_i32_1 = arith.constant 0 : i32
    return %arg0, %arg1, %c0_i32, %c0_i32_0 : i32, i32, i32, i32
  }
}

module attributes {stable_mosaic.version = 11 : i64} {
  func.func @bn_relu_pool_kernel(%arg0: i32, %arg1: i32, %arg2: memref<1x16x8x256xbf16, #tpu.memory_space<vmem>>, %arg3: memref<2x128xf32, #tpu.memory_space<vmem>>, %arg4: memref<1x8x8x128xf32, #tpu.memory_space<vmem>>) attributes {dimension_semantics = [#tpu.dimension_semantics<parallel>, #tpu.dimension_semantics<parallel>], iteration_bounds = array<i64: 2, 1>, scalar_prefetch = 0 : i64, scratch_operands = 0 : i64, tpu.core_type = #tpu.core_type<tc>, window_params = [{transform_indices = @transform_0, window_bounds = array<i64: 1, 16, 8, 256>}, {pipeline_mode = #tpu.pipeline_mode<synchronous>, transform_indices = @transform_1, window_bounds = array<i64: 2, 128>}, {transform_indices = @transform_2, window_bounds = array<i64: 1, 8, 8, 128>}]} {
    %c0 = arith.constant 0 : index
    %c0_0 = arith.constant 0 : index
    %0 = vector.load %arg3[%c0, %c0_0] : memref<2x128xf32, #tpu.memory_space<vmem>>, vector<1x128xf32>
    %c1 = arith.constant 1 : index
    %c0_1 = arith.constant 0 : index
    %1 = vector.load %arg3[%c1, %c0_1] : memref<2x128xf32, #tpu.memory_space<vmem>>, vector<1x128xf32>
    %c0_2 = arith.constant 0 : index
    %c0_3 = arith.constant 0 : index
    %c0_4 = arith.constant 0 : index
    %c0_5 = arith.constant 0 : index
    %2 = vector.load %arg2[%c0_2, %c0_3, %c0_4, %c0_5] : memref<1x16x8x256xbf16, #tpu.memory_space<vmem>>, vector<1x16x8x256xbf16>
    %3 = vector.shape_cast %2 : vector<1x16x8x256xbf16> to vector<16x8x256xbf16>
    %4 = vector.shape_cast %3 : vector<16x8x256xbf16> to vector<8x2x8x256xbf16>
    %5 = vector.extract_strided_slice %4 {offsets = [0, 0, 0, 0], sizes = [8, 1, 8, 128], strides = [1, 1, 1, 1]} : vector<8x2x8x256xbf16> to vector<8x1x8x128xbf16>
    %6 = vector.shape_cast %5 : vector<8x1x8x128xbf16> to vector<8x8x128xbf16>
    %7 = arith.extf %6 : vector<8x8x128xbf16> to vector<8x8x128xf32>
    %8 = vector.shape_cast %0 : vector<1x128xf32> to vector<1x1x128xf32>
    %9 = vector.broadcast %8 : vector<1x1x128xf32> to vector<8x8x128xf32>
    %10 = arith.mulf %7, %9 : vector<8x8x128xf32>
    %11 = vector.shape_cast %1 : vector<1x128xf32> to vector<1x1x128xf32>
    %12 = vector.broadcast %11 : vector<1x1x128xf32> to vector<8x8x128xf32>
    %13 = arith.addf %10, %12 : vector<8x8x128xf32>
    %cst = arith.constant 0.000000e+00 : f32
    %14 = vector.broadcast %cst : f32 to vector<8x8x128xf32>
    %15 = arith.maximumf %13, %14 : vector<8x8x128xf32>
    %16 = vector.extract_strided_slice %4 {offsets = [0, 0, 0, 128], sizes = [8, 1, 8, 128], strides = [1, 1, 1, 1]} : vector<8x2x8x256xbf16> to vector<8x1x8x128xbf16>
    %17 = vector.shape_cast %16 : vector<8x1x8x128xbf16> to vector<8x8x128xbf16>
    %18 = arith.extf %17 : vector<8x8x128xbf16> to vector<8x8x128xf32>
    %19 = vector.shape_cast %0 : vector<1x128xf32> to vector<1x1x128xf32>
    %20 = vector.broadcast %19 : vector<1x1x128xf32> to vector<8x8x128xf32>
    %21 = arith.mulf %18, %20 : vector<8x8x128xf32>
    %22 = vector.shape_cast %1 : vector<1x128xf32> to vector<1x1x128xf32>
    %23 = vector.broadcast %22 : vector<1x1x128xf32> to vector<8x8x128xf32>
    %24 = arith.addf %21, %23 : vector<8x8x128xf32>
    %cst_6 = arith.constant 0.000000e+00 : f32
    %25 = vector.broadcast %cst_6 : f32 to vector<8x8x128xf32>
    %26 = arith.maximumf %24, %25 : vector<8x8x128xf32>
    %27 = arith.maximumf %15, %26 : vector<8x8x128xf32>
    %28 = vector.extract_strided_slice %4 {offsets = [0, 1, 0, 0], sizes = [8, 1, 8, 128], strides = [1, 1, 1, 1]} : vector<8x2x8x256xbf16> to vector<8x1x8x128xbf16>
    %29 = vector.shape_cast %28 : vector<8x1x8x128xbf16> to vector<8x8x128xbf16>
    %30 = arith.extf %29 : vector<8x8x128xbf16> to vector<8x8x128xf32>
    %31 = vector.shape_cast %0 : vector<1x128xf32> to vector<1x1x128xf32>
    %32 = vector.broadcast %31 : vector<1x1x128xf32> to vector<8x8x128xf32>
    %33 = arith.mulf %30, %32 : vector<8x8x128xf32>
    %34 = vector.shape_cast %1 : vector<1x128xf32> to vector<1x1x128xf32>
    %35 = vector.broadcast %34 : vector<1x1x128xf32> to vector<8x8x128xf32>
    %36 = arith.addf %33, %35 : vector<8x8x128xf32>
    %cst_7 = arith.constant 0.000000e+00 : f32
    %37 = vector.broadcast %cst_7 : f32 to vector<8x8x128xf32>
    %38 = arith.maximumf %36, %37 : vector<8x8x128xf32>
    %39 = vector.extract_strided_slice %4 {offsets = [0, 1, 0, 128], sizes = [8, 1, 8, 128], strides = [1, 1, 1, 1]} : vector<8x2x8x256xbf16> to vector<8x1x8x128xbf16>
    %40 = vector.shape_cast %39 : vector<8x1x8x128xbf16> to vector<8x8x128xbf16>
    %41 = arith.extf %40 : vector<8x8x128xbf16> to vector<8x8x128xf32>
    %42 = vector.shape_cast %0 : vector<1x128xf32> to vector<1x1x128xf32>
    %43 = vector.broadcast %42 : vector<1x1x128xf32> to vector<8x8x128xf32>
    %44 = arith.mulf %41, %43 : vector<8x8x128xf32>
    %45 = vector.shape_cast %1 : vector<1x128xf32> to vector<1x1x128xf32>
    %46 = vector.broadcast %45 : vector<1x1x128xf32> to vector<8x8x128xf32>
    %47 = arith.addf %44, %46 : vector<8x8x128xf32>
    %cst_8 = arith.constant 0.000000e+00 : f32
    %48 = vector.broadcast %cst_8 : f32 to vector<8x8x128xf32>
    %49 = arith.maximumf %47, %48 : vector<8x8x128xf32>
    %50 = arith.maximumf %38, %49 : vector<8x8x128xf32>
    %51 = arith.maximumf %27, %50 : vector<8x8x128xf32>
    %c0_9 = arith.constant 0 : index
    %c0_10 = arith.constant 0 : index
    %c0_11 = arith.constant 0 : index
    %c0_12 = arith.constant 0 : index
    %52 = vector.load %arg4[%c0_9, %c0_10, %c0_11, %c0_12] : memref<1x8x8x128xf32, #tpu.memory_space<vmem>>, vector<1x8x8x128xf32>
    %53 = vector.shape_cast %52 : vector<1x8x8x128xf32> to vector<8x8x128xf32>
    %54 = vector.shape_cast %51 : vector<8x8x128xf32> to vector<1x8x8x128xf32>
    tpu.vector_store %arg4[%c0_9, %c0_10, %c0_11, %c0_12], %54 {strides = array<i32>} : memref<1x8x8x128xf32, #tpu.memory_space<vmem>>, vector<1x8x8x128xf32>,
    return
  }
  func.func @transform_0(%arg0: i32, %arg1: i32) -> (i32, i32, i32, i32) {
    %c0_i32 = arith.constant 0 : i32
    %c0_i32_0 = arith.constant 0 : i32
    %c0_i32_1 = arith.constant 0 : i32
    return %arg0, %arg1, %c0_i32, %c0_i32_0 : i32, i32, i32, i32
  }
  func.func @transform_1(%arg0: i32, %arg1: i32) -> (i32, i32) {
    %c0_i32 = arith.constant 0 : i32
    %c0_i32_0 = arith.constant 0 : i32
    %c0_i32_1 = arith.constant 0 : i32
    return %c0_i32, %c0_i32_0 : i32, i32
  }
  func.func @transform_2(%arg0: i32, %arg1: i32) -> (i32, i32, i32, i32) {
    %c0_i32 = arith.constant 0 : i32
    %c0_i32_0 = arith.constant 0 : i32
    %c0_i32_1 = arith.constant 0 : i32
    return %arg0, %arg1, %c0_i32, %c0_i32_0 : i32, i32, i32, i32
  }
}

</mosaic_0001>

<llo_original>
// kernel: conv_layer_forward.3
$region0: #{conv_layer_forward.3}
  #allocation0 [shape = 'u32[]', space=smem, size = 0x4, offset = 0x4, fixed_abs, tag = 'smem constant byte address 0x4 - core index']
  #allocation1 [shape = 'u32[144,128]{1,0:T(1,128)}', space=vmem, size = 0x12000, scoped, tag = 'internal scratch']
  %s0 = inlined_call_operand.vmem [shape: bf16[2,16,8,256], index: 0, kind: input, shape index: {}]
  %s1 = inlined_call_operand.vmem [shape: f32[2,128], index: 1, kind: input, shape index: {}]
  %s2 = inlined_call_operand.vmem [shape: f32[2,8,8,128], index: 2, kind: output, shape index: {}]
  %s3 = sld [smem:[#allocation0]]
  $region41: #{conv_layer_forward.3} parent=0
    _
  %s5 = ssub.s32 1, %s3
  %s6 = scalar_select 0, %s5, %s3
  loop: start=0, step=1, limit=4
  $region2: #{conv_layer_forward.3} parent=0 // loop_pre_header
    _
  $region3: #{conv_layer_forward.3} parent=0 // loop_header
    %s8 = sphi 0, %s12
    %p9 = scmp.ge.s32.totalorder %s8, 4
    %s15 = sphi 0, %s27
    %s16 = sphi 0, %s23
    %s17 = sphi 0, %s15
    %s18 = sphi 0, %s16
    %s19 = sphi 0, %s17
    %s20 = sphi 0, %s18
    %s32 = sphi 0, %s34
    %s35 = sphi 0, %s32
    %s36 = sphi 0, %s35
    %s52 = sphi 0, %s36
    %s56 = sphi 0, %s56
    %s58 = sphi 0, %s56
    %s59 = sphi 0, %s58
    %s73 = sphi 0, %s59
    %s81 = sphi 0, %s83
    %s84 = sphi 0, %s81
    %s85 = sphi 0, %s84
    %s101 = sphi 0, %s85
  $region4: #{conv_layer_forward.3} parent=0 // loop_header_branch
    %11 = sbr.rel (%p9) target = $region8
  $region5: #{conv_layer_forward.3} parent=0 // loop_body
    %s13 = ssub.s32 %s8, 1
    %s14 = ssub.s32 %s8, 2
    %s21 = sadd.s32 1, %s16
    %p22 = scmp.ge.s32.totalorder %s21, 1
    %s23 = scalar_select %p22, 0, %s21
    %s24 = sadd.s32 1, %s15
    %s25 = scalar_select %p22, %s24, %s15
    %p26 = scmp.ge.s32.totalorder %s25, 2
    %s27 = scalar_select %p26, 0, %s25
    %s28 = ssub.s32 %s15, %s27
    %s29 = ssub.s32 %s16, %s23
    %s30 = sor.u32 %s28, %s29
    %p31 = scmp.eq.s32.totalorder %s30, 0
    %s33 = sadd.s32 %s32, 1
    %s34 = scalar_select %p31, %s32, %s33
    %p37 = pneg %p31
    %p38 = scmp.eq.s32.totalorder %s8, 1
    %p39 = por %p37, %p38
    %p40 = scmp.ne.s32.totalorder %s32, %s35
    %p41 = scmp.eq.s32.totalorder %s8, 0
    %p42 = por %p40, %p41
    %p43 = scmp.ne.s32.totalorder %s32, %s35
    %p44 = scmp.eq.s32.totalorder %s13, 1
    %p45 = por %p43, %p44
    %p46 = scmp.ne.s32.totalorder %s35, %s36
    %p47 = scmp.eq.s32.totalorder %s13, 0
    %p48 = por %p46, %p47
    %p49 = scmp.ne.s32.totalorder %s35, %s36
    %p50 = scmp.eq.s32.totalorder %s14, 1
    %p51 = por %p49, %p50
    %p53 = scmp.ne.s32.totalorder %s36, %s52
    %p54 = scmp.eq.s32.totalorder %s14, 0
    %p55 = por %p53, %p54
    %s57 = sadd.s32 %s56, 1
    %p60 = scmp.eq.s32.totalorder %s8, 1
    %p61 = scmp.ne.s32.totalorder %s56, %s58
    %p62 = scmp.eq.s32.totalorder %s8, 0
    %p63 = por %p61, %p62
    %p64 = scmp.ne.s32.totalorder %s56, %s58
    %p65 = scmp.eq.s32.totalorder %s13, 1
    %p66 = por %p64, %p65
    %p67 = scmp.ne.s32.totalorder %s58, %s59
    %p68 = scmp.eq.s32.totalorder %s13, 0
    %p69 = por %p67, %p68
    %p70 = scmp.ne.s32.totalorder %s58, %s59
    %p71 = scmp.eq.s32.totalorder %s14, 1
    %p72 = por %p70, %p71
    %p74 = scmp.ne.s32.totalorder %s59, %s73
    %p75 = scmp.eq.s32.totalorder %s14, 0
    %p76 = por %p74, %p75
    %s77 = ssub.s32 %s15, %s27
    %s78 = ssub.s32 %s16, %s23
    %s79 = sor.u32 %s77, %s78
    %p80 = scmp.eq.s32.totalorder %s79, 0
    %s82 = sadd.s32 %s81, 1
    %s83 = scalar_select %p80, %s81, %s82
    %p86 = pneg %p80
    %p87 = scmp.eq.s32.totalorder %s8, 1
    %p88 = por %p86, %p87
    %p89 = scmp.ne.s32.totalorder %s81, %s84
    %p90 = scmp.eq.s32.totalorder %s8, 0
    %p91 = por %p89, %p90
    %p92 = scmp.ne.s32.totalorder %s81, %s84
    %p93 = scmp.eq.s32.totalorder %s13, 1
    %p94 = por %p92, %p93
    %p95 = scmp.ne.s32.totalorder %s84, %s85
    %p96 = scmp.eq.s32.totalorder %s13, 0
    %p97 = por %p95, %p96
    %p98 = scmp.ne.s32.totalorder %s84, %s85
    %p99 = scmp.eq.s32.totalorder %s14, 1
    %p100 = por %p98, %p99
    %p102 = scmp.ne.s32.totalorder %s85, %s101
    %p103 = scmp.eq.s32.totalorder %s14, 0
    %p104 = por %p102, %p103
    %p105 = scmp.le.s32.totalorder 1, %s8
    %p106 = scmp.lt.s32.totalorder %s8, 3
    %p107 = pnand %p105, %p106
    %p108 = pneg %p107
    // Predicated region
    $region9: #{conv_layer_forward.3} parent=5 // pred_check
      _
    $region10: #{conv_layer_forward.3} parent=5 // pred_check_branch
      %110 = sbr.rel (%p107) target = $region12
    $region11: #{conv_layer_forward.3} parent=5 // pred_region
      %s111 = ssub.s32 %s8, 1
      // Predicated region
      $region13: #{conv_layer_forward.3} parent=11 // pred_check
        %p112 = pneg %p69
      $region14: #{conv_layer_forward.3} parent=11 // pred_check_branch
        %114 = sbr.rel (%p112) target = $region16
      $region15: #{conv_layer_forward.3} parent=11 // pred_region
        _
      $region16: #{conv_layer_forward.3} parent=11 // pred_fallthru
        _
    $region12: #{conv_layer_forward.3} parent=5 // pred_fallthru
      _
    %p115 = scmp.lt.s32.totalorder %s8, 2
    // Predicated region
    $region17: #{conv_layer_forward.3} parent=5 // pred_check
      %p116 = pneg %p115
    $region18: #{conv_layer_forward.3} parent=5 // pred_check_branch
      %118 = sbr.rel (%p116) target = $region20
    $region19: #{conv_layer_forward.3} parent=5 // pred_region
      // Predicated region
      $region21: #{conv_layer_forward.3} parent=19 // pred_check
        %p119 = pneg %p42
      $region22: #{conv_layer_forward.3} parent=19 // pred_check_branch
        %121 = sbr.rel (%p119) target = $region24
      $region23: #{conv_layer_forward.3} parent=19 // pred_region
        %s122 = smul.u32 16, %s16
        %p123 = scmp.lt.s32.totalorder %s15, 1
        %s124 = scalar_select %p123, %s15, 1
        %p125 = scmp.lt.s32.totalorder %s122, 15
        %s126 = scalar_select %p125, %s122, 15
        %s127 = smul.addr %s126, 2
        %s128 = smul.addr %s124, 32
        %s129 = sadd.s32 %s127, %s128
        %s130 = smul.addr %s129, 4
        %s131 = scalar_lea.vmem %s0, %s130
        %s132 = smul.u32 16, %s16
      $region24: #{conv_layer_forward.3} parent=19 // pred_fallthru
        _
    $region20: #{conv_layer_forward.3} parent=5 // pred_fallthru
      _
    %p133 = scmp.le.s32.totalorder 1, %s8
    %p134 = scmp.lt.s32.totalorder %s8, 3
    %p135 = pnand %p133, %p134
    %p136 = pneg %p135
    // Predicated region
    $region25: #{conv_layer_forward.3} parent=5 // pred_check
      _
    $region26: #{conv_layer_forward.3} parent=5 // pred_check_branch
      %138 = sbr.rel (%p135) target = $region28
    $region27: #{conv_layer_forward.3} parent=5 // pred_region
      %s139 = ssub.s32 %s8, 1
      %s140 = smul.u32 16, %s18
      %p141 = scmp.lt.s32.totalorder %s17, 1
      %s142 = scalar_select %p141, %s17, 1
      %p143 = scmp.lt.s32.totalorder %s140, 15
      %s144 = scalar_select %p143, %s140, 15
      %s145 = smul.addr %s144, 2
      %s146 = smul.addr %s142, 32
      %s147 = sadd.s32 %s145, %s146
      %s148 = smul.addr %s147, 4
      %s149 = scalar_lea.vmem %s0, %s148
      %p150 = pneg %p48
      %p151 = pneg %p45
      %p152 = pneg %p69
      %p153 = pneg %p66
      %p154 = pneg %p97
      %p155 = pneg %p94
      %s156 = smul.u32 8, %s18
      %p157 = scmp.lt.s32.totalorder %s17, 1
      %s158 = scalar_select %p157, %s17, 1
      %p159 = scmp.lt.s32.totalorder %s156, 7
      %s160 = scalar_select %p159, %s156, 7
      %s161 = smul.addr %s158, 8
      %s162 = sadd.s32 %s160, %s161
      %s163 = smul.addr %s162, 8
      %s164 = scalar_lea.vmem %s2, %s163
      %s165 = smul.u32 16, %s18
      %p166 = scmp.lt.s32.totalorder %s17, 1
      %s167 = scalar_select %p166, %s17, 1
      %p168 = scmp.lt.s32.totalorder %s165, 15
      %s169 = scalar_select %p168, %s165, 15
      %s170 = smul.addr %s169, 2
      %s171 = smul.addr %s167, 32
      %s172 = sadd.s32 %s170, %s171
      %s173 = smul.addr %s172, 4
      %s174 = scalar_lea.vmem %s0, %s173
      %s175 = smul.u32 16, %s18
      %s176 = smul.u32 8, %s18
      %p177 = scmp.lt.s32.totalorder %s17, 1
      %s178 = scalar_select %p177, %s17, 1
      %p179 = scmp.lt.s32.totalorder %s176, 7
      %s180 = scalar_select %p179, %s176, 7
      %s181 = smul.addr %s178, 8
      %s182 = sadd.s32 %s180, %s181
      %s183 = smul.addr %s182, 8
      %s184 = scalar_lea.vmem %s2, %s183
      %s185 = smul.u32 8, %s18
      %v186 = vld [vmem:[%s1] sm:$0x1]
      %v187 = vld [vmem:[%s1 + $0x1] sm:$0x1]
      %v188 = vld [vmem:[%s174] sm:$0xff]
      %v189 = vld [vmem:[%s174 + $0x8] sm:$0xff]
      %v190 = vld [vmem:[%s174 + $0x10] sm:$0xff]
      %v191 = vld [vmem:[%s174 + $0x18] sm:$0xff]
      %v192 = vld [vmem:[%s174 + $0x20] sm:$0xff]
      %v193 = vld [vmem:[%s174 + $0x28] sm:$0xff]
      %v194 = vld [vmem:[%s174 + $0x30] sm:$0xff]
      %v195 = vld [vmem:[%s174 + $0x38] sm:$0xff]
      %v196 = vld [vmem:[%s174 + $0x40] sm:$0xff]
      %v197 = vld [vmem:[%s174 + $0x48] sm:$0xff]
      %v198 = vld [vmem:[%s174 + $0x50] sm:$0xff]
      %v199 = vld [vmem:[%s174 + $0x58] sm:$0xff]
      %v200 = vld [vmem:[%s174 + $0x60] sm:$0xff]
      %v201 = vld [vmem:[%s174 + $0x68] sm:$0xff]
      %v202 = vld [vmem:[%s174 + $0x70] sm:$0xff]
      %v203 = vld [vmem:[%s174 + $0x78] sm:$0xff]
      %v204 = vunpack.c.l.bf16 %v188
      %v205 = vunpack.c.l.bf16 %v190
      %v206 = vunpack.c.l.bf16 %v192
      %v207 = vunpack.c.l.bf16 %v194
      %v208 = vunpack.c.l.bf16 %v196
      %v209 = vunpack.c.l.bf16 %v198
      %v210 = vunpack.c.l.bf16 %v200
      %v211 = vunpack.c.l.bf16 %v202
      %v212 = vlaneseq
      %v213 = vshrl.u32 %v212, 7
      %v214 = vsub.s32 0, %v213
      %v215 = vrot.slane %v186, %v214
      %v216 = vmul.f32 %v204, %v215
      %v217 = vmul.f32 %v205, %v215
      %v218 = vmul.f32 %v206, %v215
      %v219 = vmul.f32 %v207, %v215
      %v220 = vmul.f32 %v208, %v215
      %v221 = vmul.f32 %v209, %v215
      %v222 = vmul.f32 %v210, %v215
      %v223 = vmul.f32 %v211, %v215
      %v224 = vlaneseq
      %v225 = vshrl.u32 %v224, 7
      %v226 = vsub.s32 0, %v225
      %v227 = vrot.slane %v187, %v226
      %v228 = vadd.f32 %v216, %v227
      %v229 = vadd.f32 %v217, %v227
      %v230 = vadd.f32 %v218, %v227
      %v231 = vadd.f32 %v219, %v227
      %v232 = vadd.f32 %v220, %v227
      %v233 = vadd.f32 %v221, %v227
      %v234 = vadd.f32 %v222, %v227
      %v235 = vadd.f32 %v223, %v227
      %v236 = vmax.f32 %v228, 0.0
      %v237 = vmax.f32 %v229, 0.0
      %v238 = vmax.f32 %v230, 0.0
      %v239 = vmax.f32 %v231, 0.0
      %v240 = vmax.f32 %v232, 0.0
      %v241 = vmax.f32 %v233, 0.0
      %v242 = vmax.f32 %v234, 0.0
      %v243 = vmax.f32 %v235, 0.0
      %v252 = vrot.slane %v188, 4
      %v253 = vrot.slane %v190, 4
      %v254 = vrot.slane %v192, 4
      %v255 = vrot.slane %v194, 4
      %v256 = vrot.slane %v196, 4
      %v257 = vrot.slane %v198, 4
      %v258 = vrot.slane %v200, 4
      %v259 = vrot.slane %v202, 4
      %v268 = vunpack.c.l.bf16 %v252
      %v269 = vunpack.c.l.bf16 %v253
      %v270 = vunpack.c.l.bf16 %v254
      %v271 = vunpack.c.l.bf16 %v255
      %v272 = vunpack.c.l.bf16 %v256
      %v273 = vunpack.c.l.bf16 %v257
      %v274 = vunpack.c.l.bf16 %v258
      %v275 = vunpack.c.l.bf16 %v259
      %v276 = vmul.f32 %v268, %v215
      %v277 = vmul.f32 %v269, %v215
      %v278 = vmul.f32 %v270, %v215
      %v279 = vmul.f32 %v271, %v215
      %v280 = vmul.f32 %v272, %v215
      %v281 = vmul.f32 %v273, %v215
      %v282 = vmul.f32 %v274, %v215
      %v283 = vmul.f32 %v275, %v215
      %v284 = vadd.f32 %v276, %v227
      %v285 = vadd.f32 %v277, %v227
      %v286 = vadd.f32 %v278, %v227
      %v287 = vadd.f32 %v279, %v227
      %v288 = vadd.f32 %v280, %v227
      %v289 = vadd.f32 %v281, %v227
      %v290 = vadd.f32 %v282, %v227
      %v291 = vadd.f32 %v283, %v227
      %v292 = vmax.f32 %v284, 0.0
      %v293 = vmax.f32 %v285, 0.0
      %v294 = vmax.f32 %v286, 0.0
      %v295 = vmax.f32 %v287, 0.0
      %v296 = vmax.f32 %v288, 0.0
      %v297 = vmax.f32 %v289, 0.0
      %v298 = vmax.f32 %v290, 0.0
      %v299 = vmax.f32 %v291, 0.0
      %v300 = vmax.f32 %v236, %v292
      %v301 = vmax.f32 %v237, %v293
      %v302 = vmax.f32 %v238, %v294
      %v303 = vmax.f32 %v239, %v295
      %v304 = vmax.f32 %v240, %v296
      %v305 = vmax.f32 %v241, %v297
      %v306 = vmax.f32 %v242, %v298
      %v307 = vmax.f32 %v243, %v299
      %v308 = vunpack.c.l.bf16 %v189
      %v309 = vunpack.c.l.bf16 %v191
      %v310 = vunpack.c.l.bf16 %v193
      %v311 = vunpack.c.l.bf16 %v195
      %v312 = vunpack.c.l.bf16 %v197
      %v313 = vunpack.c.l.bf16 %v199
      %v314 = vunpack.c.l.bf16 %v201
      %v315 = vunpack.c.l.bf16 %v203
      %v316 = vmul.f32 %v308, %v215
      %v317 = vmul.f32 %v309, %v215
      %v318 = vmul.f32 %v310, %v215
      %v319 = vmul.f32 %v311, %v215
      %v320 = vmul.f32 %v312, %v215
      %v321 = vmul.f32 %v313, %v215
      %v322 = vmul.f32 %v314, %v215
      %v323 = vmul.f32 %v315, %v215
      %v324 = vadd.f32 %v316, %v227
      %v325 = vadd.f32 %v317, %v227
      %v326 = vadd.f32 %v318, %v227
      %v327 = vadd.f32 %v319, %v227
      %v328 = vadd.f32 %v320, %v227
      %v329 = vadd.f32 %v321, %v227
      %v330 = vadd.f32 %v322, %v227
      %v331 = vadd.f32 %v323, %v227
      %v332 = vmax.f32 %v324, 0.0
      %v333 = vmax.f32 %v325, 0.0
      %v334 = vmax.f32 %v326, 0.0
      %v335 = vmax.f32 %v327, 0.0
      %v336 = vmax.f32 %v328, 0.0
      %v337 = vmax.f32 %v329, 0.0
      %v338 = vmax.f32 %v330, 0.0
      %v339 = vmax.f32 %v331, 0.0
      %v348 = vrot.slane %v189, 4
      %v349 = vrot.slane %v191, 4
      %v350 = vrot.slane %v193, 4
      %v351 = vrot.slane %v195, 4
      %v352 = vrot.slane %v197, 4
      %v353 = vrot.slane %v199, 4
      %v354 = vrot.slane %v201, 4
      %v355 = vrot.slane %v203, 4
      %v364 = vunpack.c.l.bf16 %v348
      %v365 = vunpack.c.l.bf16 %v349
      %v366 = vunpack.c.l.bf16 %v350
      %v367 = vunpack.c.l.bf16 %v351
      %v368 = vunpack.c.l.bf16 %v352
      %v369 = vunpack.c.l.bf16 %v353
      %v370 = vunpack.c.l.bf16 %v354
      %v371 = vunpack.c.l.bf16 %v355
      %v372 = vmul.f32 %v364, %v215
      %v373 = vmul.f32 %v365, %v215
      %v374 = vmul.f32 %v366, %v215
      %v375 = vmul.f32 %v367, %v215
      %v376 = vmul.f32 %v368, %v215
      %v377 = vmul.f32 %v369, %v215
      %v378 = vmul.f32 %v370, %v215
      %v379 = vmul.f32 %v371, %v215
      %v380 = vadd.f32 %v372, %v227
      %v381 = vadd.f32 %v373, %v227
      %v382 = vadd.f32 %v374, %v227
      %v383 = vadd.f32 %v375, %v227
      %v384 = vadd.f32 %v376, %v227
      %v385 = vadd.f32 %v377, %v227
      %v386 = vadd.f32 %v378, %v227
      %v387 = vadd.f32 %v379, %v227
      %v388 = vmax.f32 %v380, 0.0
      %v389 = vmax.f32 %v381, 0.0
      %v390 = vmax.f32 %v382, 0.0
      %v391 = vmax.f32 %v383, 0.0
      %v392 = vmax.f32 %v384, 0.0
      %v393 = vmax.f32 %v385, 0.0
      %v394 = vmax.f32 %v386, 0.0
      %v395 = vmax.f32 %v387, 0.0
      %v396 = vmax.f32 %v332, %v388
      %v397 = vmax.f32 %v333, %v389
      %v398 = vmax.f32 %v334, %v390
      %v399 = vmax.f32 %v335, %v391
      %v400 = vmax.f32 %v336, %v392
      %v401 = vmax.f32 %v337, %v393
      %v402 = vmax.f32 %v338, %v394
      %v403 = vmax.f32 %v339, %v395
      %v404 = vmax.f32 %v300, %v396
      %v405 = vmax.f32 %v301, %v397
      %v406 = vmax.f32 %v302, %v398
      %v407 = vmax.f32 %v303, %v399
      %v408 = vmax.f32 %v304, %v400
      %v409 = vmax.f32 %v305, %v401
      %v410 = vmax.f32 %v306, %v402
      %v411 = vmax.f32 %v307, %v403
      %412 = vst [vmem:[%s184] sm:$0xff] %v404
      %413 = vst [vmem:[%s184 + $0x8] sm:$0xff] %v405
      %414 = vst [vmem:[%s184 + $0x10] sm:$0xff] %v406
      %415 = vst [vmem:[%s184 + $0x18] sm:$0xff] %v407
      %416 = vst [vmem:[%s184 + $0x20] sm:$0xff] %v408
      %417 = vst [vmem:[%s184 + $0x28] sm:$0xff] %v409
      %418 = vst [vmem:[%s184 + $0x30] sm:$0xff] %v410
      %419 = vst [vmem:[%s184 + $0x38] sm:$0xff] %v411
      %s420 = smul.u32 8, %s18
      %p421 = scmp.lt.s32.totalorder %s17, 1
      %s422 = scalar_select %p421, %s17, 1
      %p423 = scmp.lt.s32.totalorder %s420, 7
      %s424 = scalar_select %p423, %s420, 7
      %s425 = smul.addr %s422, 8
      %s426 = sadd.s32 %s424, %s425
      %s427 = smul.addr %s426, 8
      %s428 = scalar_lea.vmem %s2, %s427
      // Predicated region
      $region29: #{conv_layer_forward.3} parent=27 // pred_check
        %p429 = pneg %p94
      $region30: #{conv_layer_forward.3} parent=27 // pred_check_branch
        %431 = sbr.rel (%p429) target = $region32
      $region31: #{conv_layer_forward.3} parent=27 // pred_region
        %s432 = smul.u32 8, %s18
      $region32: #{conv_layer_forward.3} parent=27 // pred_fallthru
        _
    $region28: #{conv_layer_forward.3} parent=5 // pred_fallthru
      _
    %p433 = scmp.le.s32.totalorder 2, %s8
    // Predicated region
    $region33: #{conv_layer_forward.3} parent=5 // pred_check
      %p434 = pneg %p433
    $region34: #{conv_layer_forward.3} parent=5 // pred_check_branch
      %436 = sbr.rel (%p434) target = $region36
    $region35: #{conv_layer_forward.3} parent=5 // pred_region
      %s437 = ssub.s32 %s8, 2
      // Predicated region
      $region37: #{conv_layer_forward.3} parent=35 // pred_check
        %p438 = pneg %p100
      $region38: #{conv_layer_forward.3} parent=35 // pred_check_branch
        %440 = sbr.rel (%p438) target = $region40
      $region39: #{conv_layer_forward.3} parent=35 // pred_region
        %s441 = smul.u32 8, %s20
        %p442 = scmp.lt.s32.totalorder %s19, 1
        %s443 = scalar_select %p442, %s19, 1
        %p444 = scmp.lt.s32.totalorder %s441, 7
        %s445 = scalar_select %p444, %s441, 7
        %s446 = smul.addr %s443, 8
        %s447 = sadd.s32 %s445, %s446
        %s448 = smul.addr %s447, 8
        %s449 = scalar_lea.vmem %s2, %s448
      $region40: #{conv_layer_forward.3} parent=35 // pred_fallthru
        _
    $region36: #{conv_layer_forward.3} parent=5 // pred_fallthru
      _
  $region6: #{conv_layer_forward.3} parent=0 // loop_footer
    %s12 = sadd.s32 1, %s8
  $region7: #{conv_layer_forward.3} parent=0 // loop_footer_branch
    %7 = sbr.rel target = $region3
  $region8: #{conv_layer_forward.3} parent=0 // loop_exit
    _

// kernel: conv_layer_forward.2
$region0: #{conv_layer_forward.2}
  #allocation0 [shape = 'u32[]', space=smem, size = 0x4, offset = 0x4, fixed_abs, tag = 'smem constant byte address 0x4 - core index']
  #allocation1 [shape = 'u32[144,128]{1,0:T(1,128)}', space=vmem, size = 0x12000, scoped, tag = 'internal scratch']
  %s0 = inlined_call_operand.vmem [shape: bf16[2,256,40], index: 0, kind: input, shape index: {}]
  %s1 = inlined_call_operand.vmem [shape: bf16[40,128], index: 1, kind: input, shape index: {}]
  %s2 = inlined_call_operand.vmem [shape: f32[256,1], index: 2, kind: input, shape index: {}]
  %s3 = inlined_call_operand.vmem [shape: bf16[2,256,128], index: 3, kind: output, shape index: {0}]
  %s4 = inlined_call_operand.vmem [shape: f32[2,1,1,128], index: 4, kind: output, shape index: {1}]
  %s5 = inlined_call_operand.vmem [shape: f32[2,1,1,128], index: 5, kind: output, shape index: {2}]
  %6 = xla_tuple %s3, %s4, %s5
  %s7 = sld [smem:[#allocation0]]
  $region61: #{conv_layer_forward.2} parent=0
    _
  %s9 = ssub.s32 1, %s7
  %s10 = scalar_select 0, %s9, %s7
  loop: start=0, step=1, limit=4
  $region2: #{conv_layer_forward.2} parent=0 // loop_pre_header
    _
  $region3: #{conv_layer_forward.2} parent=0 // loop_header
    %s12 = sphi 0, %s16
    %p13 = scmp.ge.s32.totalorder %s12, 4
    %s19 = sphi 0, %s31
    %s20 = sphi 0, %s27
    %s21 = sphi 0, %s19
    %s22 = sphi 0, %s20
    %s23 = sphi 0, %s21
    %s24 = sphi 0, %s22
    %s36 = sphi 0, %s38
    %s39 = sphi 0, %s36
    %s40 = sphi 0, %s39
    %s56 = sphi 0, %s40
    %s60 = sphi 0, %s60
    %s62 = sphi 0, %s60
    %s63 = sphi 0, %s62
    %s77 = sphi 0, %s63
    %s81 = sphi 0, %s81
    %s83 = sphi 0, %s81
    %s84 = sphi 0, %s83
    %s98 = sphi 0, %s84
    %s106 = sphi 0, %s108
    %s109 = sphi 0, %s106
    %s110 = sphi 0, %s109
    %s126 = sphi 0, %s110
    %s134 = sphi 0, %s136
    %s137 = sphi 0, %s134
    %s138 = sphi 0, %s137
    %s154 = sphi 0, %s138
    %s162 = sphi 0, %s164
    %s165 = sphi 0, %s162
    %s166 = sphi 0, %s165
    %s182 = sphi 0, %s166
  $region4: #{conv_layer_forward.2} parent=0 // loop_header_branch
    %15 = sbr.rel (%p13) target = $region8
  $region5: #{conv_layer_forward.2} parent=0 // loop_body
    %s17 = ssub.s32 %s12, 1
    %s18 = ssub.s32 %s12, 2
    %s25 = sadd.s32 1, %s20
    %p26 = scmp.ge.s32.totalorder %s25, 1
    %s27 = scalar_select %p26, 0, %s25
    %s28 = sadd.s32 1, %s19
    %s29 = scalar_select %p26, %s28, %s19
    %p30 = scmp.ge.s32.totalorder %s29, 2
    %s31 = scalar_select %p30, 0, %s29
    %s32 = ssub.s32 %s19, %s31
    %s33 = ssub.s32 %s20, %s27
    %s34 = sor.u32 %s32, %s33
    %p35 = scmp.eq.s32.totalorder %s34, 0
    %s37 = sadd.s32 %s36, 1
    %s38 = scalar_select %p35, %s36, %s37
    %p41 = pneg %p35
    %p42 = scmp.eq.s32.totalorder %s12, 1
    %p43 = por %p41, %p42
    %p44 = scmp.ne.s32.totalorder %s36, %s39
    %p45 = scmp.eq.s32.totalorder %s12, 0
    %p46 = por %p44, %p45
    %p47 = scmp.ne.s32.totalorder %s36, %s39
    %p48 = scmp.eq.s32.totalorder %s17, 1
    %p49 = por %p47, %p48
    %p50 = scmp.ne.s32.totalorder %s39, %s40
    %p51 = scmp.eq.s32.totalorder %s17, 0
    %p52 = por %p50, %p51
    %p53 = scmp.ne.s32.totalorder %s39, %s40
    %p54 = scmp.eq.s32.totalorder %s18, 1
    %p55 = por %p53, %p54
    %p57 = scmp.ne.s32.totalorder %s40, %s56
    %p58 = scmp.eq.s32.totalorder %s18, 0
    %p59 = por %p57, %p58
    %s61 = sadd.s32 %s60, 1
    %p64 = scmp.eq.s32.totalorder %s12, 1
    %p65 = scmp.ne.s32.totalorder %s60, %s62
    %p66 = scmp.eq.s32.totalorder %s12, 0
    %p67 = por %p65, %p66
    %p68 = scmp.ne.s32.totalorder %s60, %s62
    %p69 = scmp.eq.s32.totalorder %s17, 1
    %p70 = por %p68, %p69
    %p71 = scmp.ne.s32.totalorder %s62, %s63
    %p72 = scmp.eq.s32.totalorder %s17, 0
    %p73 = por %p71, %p72
    %p74 = scmp.ne.s32.totalorder %s62, %s63
    %p75 = scmp.eq.s32.totalorder %s18, 1
    %p76 = por %p74, %p75
    %p78 = scmp.ne.s32.totalorder %s63, %s77
    %p79 = scmp.eq.s32.totalorder %s18, 0
    %p80 = por %p78, %p79
    %s82 = sadd.s32 %s81, 1
    %p85 = scmp.eq.s32.totalorder %s12, 1
    %p86 = scmp.ne.s32.totalorder %s81, %s83
    %p87 = scmp.eq.s32.totalorder %s12, 0
    %p88 = por %p86, %p87
    %p89 = scmp.ne.s32.totalorder %s81, %s83
    %p90 = scmp.eq.s32.totalorder %s17, 1
    %p91 = por %p89, %p90
    %p92 = scmp.ne.s32.totalorder %s83, %s84
    %p93 = scmp.eq.s32.totalorder %s17, 0
    %p94 = por %p92, %p93
    %p95 = scmp.ne.s32.totalorder %s83, %s84
    %p96 = scmp.eq.s32.totalorder %s18, 1
    %p97 = por %p95, %p96
    %p99 = scmp.ne.s32.totalorder %s84, %s98
    %p100 = scmp.eq.s32.totalorder %s18, 0
    %p101 = por %p99, %p100
    %s102 = ssub.s32 %s19, %s31
    %s103 = ssub.s32 %s20, %s27
    %s104 = sor.u32 %s102, %s103
    %p105 = scmp.eq.s32.totalorder %s104, 0
    %s107 = sadd.s32 %s106, 1
    %s108 = scalar_select %p105, %s106, %s107
    %p111 = pneg %p105
    %p112 = scmp.eq.s32.totalorder %s12, 1
    %p113 = por %p111, %p112
    %p114 = scmp.ne.s32.totalorder %s106, %s109
    %p115 = scmp.eq.s32.totalorder %s12, 0
    %p116 = por %p114, %p115
    %p117 = scmp.ne.s32.totalorder %s106, %s109
    %p118 = scmp.eq.s32.totalorder %s17, 1
    %p119 = por %p117, %p118
    %p120 = scmp.ne.s32.totalorder %s109, %s110
    %p121 = scmp.eq.s32.totalorder %s17, 0
    %p122 = por %p120, %p121
    %p123 = scmp.ne.s32.totalorder %s109, %s110
    %p124 = scmp.eq.s32.totalorder %s18, 1
    %p125 = por %p123, %p124
    %p127 = scmp.ne.s32.totalorder %s110, %s126
    %p128 = scmp.eq.s32.totalorder %s18, 0
    %p129 = por %p127, %p128
    %s130 = ssub.s32 %s19, %s31
    %s131 = ssub.s32 %s20, %s27
    %s132 = sor.u32 %s130, %s131
    %p133 = scmp.eq.s32.totalorder %s132, 0
    %s135 = sadd.s32 %s134, 1
    %s136 = scalar_select %p133, %s134, %s135
    %p139 = pneg %p133
    %p140 = scmp.eq.s32.totalorder %s12, 1
    %p141 = por %p139, %p140
    %p142 = scmp.ne.s32.totalorder %s134, %s137
    %p143 = scmp.eq.s32.totalorder %s12, 0
    %p144 = por %p142, %p143
    %p145 = scmp.ne.s32.totalorder %s134, %s137
    %p146 = scmp.eq.s32.totalorder %s17, 1
    %p147 = por %p145, %p146
    %p148 = scmp.ne.s32.totalorder %s137, %s138
    %p149 = scmp.eq.s32.totalorder %s17, 0
    %p150 = por %p148, %p149
    %p151 = scmp.ne.s32.totalorder %s137, %s138
    %p152 = scmp.eq.s32.totalorder %s18, 1
    %p153 = por %p151, %p152
    %p155 = scmp.ne.s32.totalorder %s138, %s154
    %p156 = scmp.eq.s32.totalorder %s18, 0
    %p157 = por %p155, %p156
    %s158 = ssub.s32 %s19, %s31
    %s159 = ssub.s32 %s20, %s27
    %s160 = sor.u32 %s158, %s159
    %p161 = scmp.eq.s32.totalorder %s160, 0
    %s163 = sadd.s32 %s162, 1
    %s164 = scalar_select %p161, %s162, %s163
    %p167 = pneg %p161
    %p168 = scmp.eq.s32.totalorder %s12, 1
    %p169 = por %p167, %p168
    %p170 = scmp.ne.s32.totalorder %s162, %s165
    %p171 = scmp.eq.s32.totalorder %s12, 0
    %p172 = por %p170, %p171
    %p173 = scmp.ne.s32.totalorder %s162, %s165
    %p174 = scmp.eq.s32.totalorder %s17, 1
    %p175 = por %p173, %p174
    %p176 = scmp.ne.s32.totalorder %s165, %s166
    %p177 = scmp.eq.s32.totalorder %s17, 0
    %p178 = por %p176, %p177
    %p179 = scmp.ne.s32.totalorder %s165, %s166
    %p180 = scmp.eq.s32.totalorder %s18, 1
    %p181 = por %p179, %p180
    %p183 = scmp.ne.s32.totalorder %s166, %s182
    %p184 = scmp.eq.s32.totalorder %s18, 0
    %p185 = por %p183, %p184
    %p186 = scmp.le.s32.totalorder 1, %s12
    %p187 = scmp.lt.s32.totalorder %s12, 3
    %p188 = pnand %p186, %p187
    %p189 = pneg %p188
    // Predicated region
    $region9: #{conv_layer_forward.2} parent=5 // pred_check
      _
    $region10: #{conv_layer_forward.2} parent=5 // pred_check_branch
      %191 = sbr.rel (%p188) target = $region12
    $region11: #{conv_layer_forward.2} parent=5 // pred_region
      %s192 = ssub.s32 %s12, 1
      // Predicated region
      $region13: #{conv_layer_forward.2} parent=11 // pred_check
        %p193 = pneg %p73
      $region14: #{conv_layer_forward.2} parent=11 // pred_check_branch
        %195 = sbr.rel (%p193) target = $region16
      $region15: #{conv_layer_forward.2} parent=11 // pred_region
        _
      $region16: #{conv_layer_forward.2} parent=11 // pred_fallthru
        _
      // Predicated region
      $region17: #{conv_layer_forward.2} parent=11 // pred_check
        %p196 = pneg %p94
      $region18: #{conv_layer_forward.2} parent=11 // pred_check_branch
        %198 = sbr.rel (%p196) target = $region20
      $region19: #{conv_layer_forward.2} parent=11 // pred_region
        _
      $region20: #{conv_layer_forward.2} parent=11 // pred_fallthru
        _
    $region12: #{conv_layer_forward.2} parent=5 // pred_fallthru
      _
    %p199 = scmp.lt.s32.totalorder %s12, 2
    // Predicated region
    $region21: #{conv_layer_forward.2} parent=5 // pred_check
      %p200 = pneg %p199
    $region22: #{conv_layer_forward.2} parent=5 // pred_check_branch
      %202 = sbr.rel (%p200) target = $region24
    $region23: #{conv_layer_forward.2} parent=5 // pred_region
      // Predicated region
      $region25: #{conv_layer_forward.2} parent=23 // pred_check
        %p203 = pneg %p46
      $region26: #{conv_layer_forward.2} parent=23 // pred_check_branch
        %205 = sbr.rel (%p203) target = $region28
      $region27: #{conv_layer_forward.2} parent=23 // pred_region
        %s206 = smul.u32 32, %s20
        %p207 = scmp.lt.s32.totalorder %s19, 1
        %s208 = scalar_select %p207, %s19, 1
        %p209 = scmp.lt.s32.totalorder %s206, 31
        %s210 = scalar_select %p209, %s206, 31
        %s211 = smul.addr %s208, 32
        %s212 = sadd.s32 %s210, %s211
        %s213 = smul.addr %s212, 4
        %s214 = scalar_lea.vmem %s0, %s213
        %s215 = smul.u32 32, %s20
      $region28: #{conv_layer_forward.2} parent=23 // pred_fallthru
        _
    $region24: #{conv_layer_forward.2} parent=5 // pred_fallthru
      _
    %p216 = scmp.le.s32.totalorder 1, %s12
    %p217 = scmp.lt.s32.totalorder %s12, 3
    %p218 = pnand %p216, %p217
    %p219 = pneg %p218
    // Predicated region
    $region29: #{conv_layer_forward.2} parent=5 // pred_check
      _
    $region30: #{conv_layer_forward.2} parent=5 // pred_check_branch
      %221 = sbr.rel (%p218) target = $region32
    $region31: #{conv_layer_forward.2} parent=5 // pred_region
      %s222 = ssub.s32 %s12, 1
      %s223 = smul.u32 32, %s22
      %p224 = scmp.lt.s32.totalorder %s21, 1
      %s225 = scalar_select %p224, %s21, 1
      %p226 = scmp.lt.s32.totalorder %s223, 31
      %s227 = scalar_select %p226, %s223, 31
      %s228 = smul.addr %s225, 32
      %s229 = sadd.s32 %s227, %s228
      %s230 = smul.addr %s229, 4
      %s231 = scalar_lea.vmem %s0, %s230
      %p232 = pneg %p52
      %p233 = pneg %p49
      %p234 = pneg %p73
      %p235 = pneg %p70
      %p236 = pneg %p94
      %p237 = pneg %p91
      %p238 = pneg %p122
      %p239 = pneg %p119
      %s240 = smul.u32 32, %s22
      %p241 = scmp.lt.s32.totalorder %s21, 1
      %s242 = scalar_select %p241, %s21, 1
      %p243 = scmp.lt.s32.totalorder %s240, 31
      %s244 = scalar_select %p243, %s240, 31
      %s245 = smul.addr %s242, 32
      %s246 = sadd.s32 %s244, %s245
      %s247 = smul.addr %s246, 4
      %s248 = scalar_lea.vmem %s3, %s247
      %p249 = pneg %p150
      %p250 = pneg %p147
      %p251 = scmp.lt.s32.totalorder %s21, 1
      %s252 = scalar_select %p251, %s21, 1
      %p253 = scmp.lt.s32.totalorder %s22, 0
      %s254 = scalar_select %p253, %s22, 0
      %s255 = sadd.s32 %s254, %s252
      %s256 = scalar_lea.vmem %s4, %s255
      %p257 = pneg %p178
      %p258 = pneg %p175
      %p259 = scmp.lt.s32.totalorder %s21, 1
      %s260 = scalar_select %p259, %s21, 1
      %p261 = scmp.lt.s32.totalorder %s22, 0
      %s262 = scalar_select %p261, %s22, 0
      %s263 = sadd.s32 %s262, %s260
      %s264 = scalar_lea.vmem %s5, %s263
      %s265 = smul.u32 32, %s22
      %p266 = scmp.lt.s32.totalorder %s21, 1
      %s267 = scalar_select %p266, %s21, 1
      %p268 = scmp.lt.s32.totalorder %s265, 31
      %s269 = scalar_select %p268, %s265, 31
      %s270 = smul.addr %s267, 32
      %s271 = sadd.s32 %s269, %s270
      %s272 = smul.addr %s271, 4
      %s273 = scalar_lea.vmem %s0, %s272
      %s274 = smul.u32 32, %s22
      %s275 = smul.u32 32, %s22
      %p276 = scmp.lt.s32.totalorder %s21, 1
      %s277 = scalar_select %p276, %s21, 1
      %p278 = scmp.lt.s32.totalorder %s275, 31
      %s279 = scalar_select %p278, %s275, 31
      %s280 = smul.addr %s277, 32
      %s281 = sadd.s32 %s279, %s280
      %s282 = smul.addr %s281, 4
      %s283 = scalar_lea.vmem %s3, %s282
      %s284 = smul.u32 32, %s22
      %p285 = scmp.lt.s32.totalorder %s21, 1
      %s286 = scalar_select %p285, %s21, 1
      %p287 = scmp.lt.s32.totalorder %s22, 0
      %s288 = scalar_select %p287, %s22, 0
      %s289 = sadd.s32 %s288, %s286
      %s290 = scalar_lea.vmem %s4, %s289
      %p291 = scmp.lt.s32.totalorder %s21, 1
      %s292 = scalar_select %p291, %s21, 1
      %p293 = scmp.lt.s32.totalorder %s22, 0
      %s294 = scalar_select %p293, %s22, 0
      %s295 = sadd.s32 %s294, %s292
      %s296 = scalar_lea.vmem %s5, %s295
      %v298 = vld [vmem:[%s273] sm:$0xf]
      %v299 = vld [vmem:[%s273 + $0x4] sm:$0xf]
      %v300 = vld [vmem:[%s273 + $0x8] sm:$0xf]
      %v301 = vld [vmem:[%s273 + $0xc] sm:$0xf]
      %v302 = vld [vmem:[%s273 + $0x10] sm:$0xf]
      %v303 = vld [vmem:[%s273 + $0x14] sm:$0xf]
      %v304 = vld [vmem:[%s273 + $0x18] sm:$0xf]
      %v305 = vld [vmem:[%s273 + $0x1c] sm:$0xf]
      %v306 = vld [vmem:[%s273 + $0x20] sm:$0xf]
      %v307 = vld [vmem:[%s273 + $0x24] sm:$0xf]
      %v308 = vld [vmem:[%s273 + $0x28] sm:$0xf]
      %v309 = vld [vmem:[%s273 + $0x2c] sm:$0xf]
      %v310 = vld [vmem:[%s273 + $0x30] sm:$0xf]
      %v311 = vld [vmem:[%s273 + $0x34] sm:$0xf]
      %v312 = vld [vmem:[%s273 + $0x38] sm:$0xf]
      %v313 = vld [vmem:[%s273 + $0x3c] sm:$0xf]
      %v314 = vld [vmem:[%s273 + $0x40] sm:$0xf]
      %v315 = vld [vmem:[%s273 + $0x44] sm:$0xf]
      %v316 = vld [vmem:[%s273 + $0x48] sm:$0xf]
      %v317 = vld [vmem:[%s273 + $0x4c] sm:$0xf]
      %v318 = vld [vmem:[%s273 + $0x50] sm:$0xf]
      %v319 = vld [vmem:[%s273 + $0x54] sm:$0xf]
      %v320 = vld [vmem:[%s273 + $0x58] sm:$0xf]
      %v321 = vld [vmem:[%s273 + $0x5c] sm:$0xf]
      %v322 = vld [vmem:[%s273 + $0x60] sm:$0xf]
      %v323 = vld [vmem:[%s273 + $0x64] sm:$0xf]
      %v324 = vld [vmem:[%s273 + $0x68] sm:$0xf]
      %v325 = vld [vmem:[%s273 + $0x6c] sm:$0xf]
      %v326 = vld [vmem:[%s273 + $0x70] sm:$0xf]
      %v327 = vld [vmem:[%s273 + $0x74] sm:$0xf]
      %v328 = vld [vmem:[%s273 + $0x78] sm:$0xf]
      %v329 = vld [vmem:[%s273 + $0x7c] sm:$0xf]
      %v330 = vld [vmem:[%s1] sm:$0xf]
      %v331 = vld [vmem:[%s1 + $0x4] sm:$0xf]
      %v332 = vld [vmem:[%s1 + $0x8] sm:$0xf]
      %v333 = vld [vmem:[%s1 + $0xc] sm:$0xf]
      %v334 = vld [vmem:[%s1 + $0x10] sm:$0xf]
      %v367 = vunpack.c.l.b16 %v298
      %v368 = vunpack.c.l.b16 %v299
      %v369 = vunpack.c.l.b16 %v300
      %v370 = vunpack.c.l.b16 %v301
      %v371 = vunpack.c.l.b16 %v302
      %v372 = vunpack.c.l.b16 %v303
      %v373 = vunpack.c.l.b16 %v304
      %v374 = vunpack.c.l.b16 %v305
      %v375 = vunpack.c.l.b16 %v306
      %v376 = vunpack.c.l.b16 %v307
      %v377 = vunpack.c.l.b16 %v308
      %v378 = vunpack.c.l.b16 %v309
      %v379 = vunpack.c.l.b16 %v310
      %v380 = vunpack.c.l.b16 %v311
      %v381 = vunpack.c.l.b16 %v312
      %v382 = vunpack.c.l.b16 %v313
      %v383 = vunpack.c.l.b16 %v314
      %v384 = vunpack.c.l.b16 %v315
      %v385 = vunpack.c.l.b16 %v316
      %v386 = vunpack.c.l.b16 %v317
      %v387 = vunpack.c.l.b16 %v318
      %v388 = vunpack.c.l.b16 %v319
      %v389 = vunpack.c.l.b16 %v320
      %v390 = vunpack.c.l.b16 %v321
      %v391 = vunpack.c.l.b16 %v322
      %v392 = vunpack.c.l.b16 %v323
      %v393 = vunpack.c.l.b16 %v324
      %v394 = vunpack.c.l.b16 %v325
      %v395 = vunpack.c.l.b16 %v326
      %v396 = vunpack.c.l.b16 %v327
      %v397 = vunpack.c.l.b16 %v328
      %v398 = vunpack.c.l.b16 %v329
      %v399 = vpack.c.b16 %v368, %v367
      %v400 = vpack.c.b16 %v370, %v369
      %v401 = vpack.c.b16 %v372, %v371
      %v402 = vpack.c.b16 %v374, %v373
      %v403 = vpack.c.b16 %v376, %v375
      %v404 = vpack.c.b16 %v378, %v377
      %v405 = vpack.c.b16 %v380, %v379
      %v406 = vpack.c.b16 %v382, %v381
      %v407 = vpack.c.b16 %v384, %v383
      %v408 = vpack.c.b16 %v386, %v385
      %v409 = vpack.c.b16 %v388, %v387
      %v410 = vpack.c.b16 %v390, %v389
      %v411 = vpack.c.b16 %v392, %v391
      %v412 = vpack.c.b16 %v394, %v393
      %v413 = vpack.c.b16 %v396, %v395
      %v414 = vpack.c.b16 %v398, %v397
      %v420 = vunpack.c.l.b16 %v330
      %v421 = vunpack.c.l.b16 %v331
      %v422 = vunpack.c.l.b16 %v332
      %v423 = vunpack.c.l.b16 %v333
      %v424 = vunpack.c.l.b16 %v334
      %v425 = vpack.c.b16 %v421, %v420
      %v426 = vpack.c.b16 %v423, %v422
      %v427 = vpack.c.b16 %v424, %v424
      %vm430 = vcmask 326656
      %v432 = vsel %vm430, %v399, 0
      %v435 = vsel %vm430, %v400, 0
      %v438 = vsel %vm430, %v401, 0
      %v441 = vsel %vm430, %v402, 0
      %v444 = vsel %vm430, %v403, 0
      %v447 = vsel %vm430, %v404, 0
      %v450 = vsel %vm430, %v405, 0
      %v453 = vsel %vm430, %v406, 0
      %v456 = vsel %vm430, %v407, 0
      %v459 = vsel %vm430, %v408, 0
      %v462 = vsel %vm430, %v409, 0
      %v465 = vsel %vm430, %v410, 0
      %v468 = vsel %vm430, %v411, 0
      %v471 = vsel %vm430, %v412, 0
      %v474 = vsel %vm430, %v413, 0
      %v477 = vsel %vm430, %v414, 0
      %vm479 = vcmask 1043456
      %v481 = vsel %vm479, %v427, 0
      %483 = vmatprep.subr.bf16.mxu0 0
      %484 = vmatpush1.bf16.msra.mxu0 0
      %485 = vmatprep.subr.bf16.mxu0 0
      %486 = vmatpush1.bf16.msra.mxu0 0
      %487 = vmatprep.subr.bf16.mxu0 0
      %488 = vmatpush1.bf16.msra.mxu0 0
      %489 = vmatprep.subr.bf16.mxu0 0
      %490 = vmatpush1.bf16.msra.mxu0 0
      %491 = vmatprep.subr.bf16.mxu0 0
      %492 = vmatpush1.bf16.msra.mxu0 0
      %493 = vmatprep.subr.bf16.mxu0 0
      %494 = vmatpush1.bf16.msra.mxu0 %v481
      %495 = vmatprep.subr.bf16.mxu0 0
      %496 = vmatpush1.bf16.msra.mxu0 %v426
      %497 = vmatprep.subr.bf16.mxu0 0
      %498 = vmatpush1.bf16.msra.mxu0 %v425
      %499 = vmatprep.subr.bf16.mxu0 0
      %500 = vmatpush2.bf16.msra.mxu0 0
      %501 = vmatprep.subr.bf16.mxu0 0
      %502 = vmatpush2.bf16.msra.mxu0 0
      %503 = vmatprep.subr.bf16.mxu0 0
      %504 = vmatpush2.bf16.msra.mxu0 0
      %505 = vmatprep.subr.bf16.mxu0 0
      %506 = vmatpush2.bf16.msra.mxu0 0
      %507 = vmatprep.subr.bf16.mxu0 0
      %508 = vmatpush2.bf16.msra.mxu0 0
      %509 = vmatprep.subr.bf16.mxu0 0
      %510 = vmatpush2.bf16.msra.mxu0 0
      %511 = vmatprep.subr.bf16.mxu0 0
      %512 = vmatpush2.bf16.msra.mxu0 0
      %513 = vmatprep.subr.bf16.mxu0 0
      %514 = vmatpush2.bf16.msra.mxu0 0
      %515 = vmatprep.mubr.bf16.mxu0 0
      %516 = vmatmul.mubr.bf16.gmra.mxu0 %v432
      %v517 = vpop.f32.mrf.mxu0
      %v518 = vadd.f32 0.0, %v517
      %v519 = vpop.f32.mrf.mxu0
      %v520 = vpop.f32.mrf.mxu0
      %v521 = vadd.f32 0.0, %v520
      %v522 = vpop.f32.mrf.mxu0
      %523 = vmatprep.mubr.bf16.mxu0 0
      %524 = vmatmul.mubr.bf16.gmra.mxu0 %v435
      %v525 = vpop.f32.mrf.mxu0
      %v526 = vadd.f32 0.0, %v525
      %v527 = vpop.f32.mrf.mxu0
      %v528 = vpop.f32.mrf.mxu0
      %v529 = vadd.f32 0.0, %v528
      %v530 = vpop.f32.mrf.mxu0
      %531 = vmatprep.mubr.bf16.mxu0 0
      %532 = vmatmul.mubr.bf16.gmra.mxu0 %v438
      %v533 = vpop.f32.mrf.mxu0
      %v534 = vadd.f32 0.0, %v533
      %v535 = vpop.f32.mrf.mxu0
      %v536 = vpop.f32.mrf.mxu0
      %v537 = vadd.f32 0.0, %v536
      %v538 = vpop.f32.mrf.mxu0
      %539 = vmatprep.mubr.bf16.mxu0 0
      %540 = vmatmul.mubr.bf16.gmra.mxu0 %v441
      %v541 = vpop.f32.mrf.mxu0
      %v542 = vadd.f32 0.0, %v541
      %v543 = vpop.f32.mrf.mxu0
      %v544 = vpop.f32.mrf.mxu0
      %v545 = vadd.f32 0.0, %v544
      %v546 = vpop.f32.mrf.mxu0
      %547 = vmatprep.mubr.bf16.mxu0 0
      %548 = vmatmul.mubr.bf16.gmra.mxu0 %v444
      %v549 = vpop.f32.mrf.mxu0
      %v550 = vadd.f32 0.0, %v549
      %v551 = vpop.f32.mrf.mxu0
      %v552 = vpop.f32.mrf.mxu0
      %v553 = vadd.f32 0.0, %v552
      %v554 = vpop.f32.mrf.mxu0
      %555 = vmatprep.mubr.bf16.mxu0 0
      %556 = vmatmul.mubr.bf16.gmra.mxu0 %v447
      %v557 = vpop.f32.mrf.mxu0
      %v558 = vadd.f32 0.0, %v557
      %v559 = vpop.f32.mrf.mxu0
      %v560 = vpop.f32.mrf.mxu0
      %v561 = vadd.f32 0.0, %v560
      %v562 = vpop.f32.mrf.mxu0
      %563 = vmatprep.mubr.bf16.mxu0 0
      %564 = vmatmul.mubr.bf16.gmra.mxu0 %v450
      %v565 = vpop.f32.mrf.mxu0
      %v566 = vadd.f32 0.0, %v565
      %v567 = vpop.f32.mrf.mxu0
      %v568 = vpop.f32.mrf.mxu0
      %v569 = vadd.f32 0.0, %v568
      %v570 = vpop.f32.mrf.mxu0
      %571 = vmatprep.mubr.bf16.mxu0 0
      %572 = vmatmul.mubr.bf16.gmra.mxu0 %v453
      %v573 = vpop.f32.mrf.mxu0
      %v574 = vadd.f32 0.0, %v573
      %v575 = vpop.f32.mrf.mxu0
      %v576 = vpop.f32.mrf.mxu0
      %v577 = vadd.f32 0.0, %v576
      %v578 = vpop.f32.mrf.mxu0
      %579 = vmatprep.mubr.bf16.mxu0 0
      %580 = vmatmul.mubr.bf16.gmra.mxu0 %v456
      %v581 = vpop.f32.mrf.mxu0
      %v582 = vadd.f32 0.0, %v581
      %v583 = vpop.f32.mrf.mxu0
      %v584 = vpop.f32.mrf.mxu0
      %v585 = vadd.f32 0.0, %v584
      %v586 = vpop.f32.mrf.mxu0
      %587 = vmatprep.mubr.bf16.mxu0 0
      %588 = vmatmul.mubr.bf16.gmra.mxu0 %v459
      %v589 = vpop.f32.mrf.mxu0
      %v590 = vadd.f32 0.0, %v589
      %v591 = vpop.f32.mrf.mxu0
      %v592 = vpop.f32.mrf.mxu0
      %v593 = vadd.f32 0.0, %v592
      %v594 = vpop.f32.mrf.mxu0
      %595 = vmatprep.mubr.bf16.mxu0 0
      %596 = vmatmul.mubr.bf16.gmra.mxu0 %v462
      %v597 = vpop.f32.mrf.mxu0
      %v598 = vadd.f32 0.0, %v597
      %v599 = vpop.f32.mrf.mxu0
      %v600 = vpop.f32.mrf.mxu0
      %v601 = vadd.f32 0.0, %v600
      %v602 = vpop.f32.mrf.mxu0
      %603 = vmatprep.mubr.bf16.mxu0 0
      %604 = vmatmul.mubr.bf16.gmra.mxu0 %v465
      %v605 = vpop.f32.mrf.mxu0
      %v606 = vadd.f32 0.0, %v605
      %v607 = vpop.f32.mrf.mxu0
      %v608 = vpop.f32.mrf.mxu0
      %v609 = vadd.f32 0.0, %v608
      %v610 = vpop.f32.mrf.mxu0
      %611 = vmatprep.mubr.bf16.mxu0 0
      %612 = vmatmul.mubr.bf16.gmra.mxu0 %v468
      %v613 = vpop.f32.mrf.mxu0
      %v614 = vadd.f32 0.0, %v613
      %v615 = vpop.f32.mrf.mxu0
      %v616 = vpop.f32.mrf.mxu0
      %v617 = vadd.f32 0.0, %v616
      %v618 = vpop.f32.mrf.mxu0
      %619 = vmatprep.mubr.bf16.mxu0 0
      %620 = vmatmul.mubr.bf16.gmra.mxu0 %v471
      %v621 = vpop.f32.mrf.mxu0
      %v622 = vadd.f32 0.0, %v621
      %v623 = vpop.f32.mrf.mxu0
      %v624 = vpop.f32.mrf.mxu0
      %v625 = vadd.f32 0.0, %v624
      %v626 = vpop.f32.mrf.mxu0
      %627 = vmatprep.mubr.bf16.mxu0 0
      %628 = vmatmul.mubr.bf16.gmra.mxu0 %v474
      %v629 = vpop.f32.mrf.mxu0
      %v630 = vadd.f32 0.0, %v629
      %v631 = vpop.f32.mrf.mxu0
      %v632 = vpop.f32.mrf.mxu0
      %v633 = vadd.f32 0.0, %v632
      %v634 = vpop.f32.mrf.mxu0
      %635 = vmatprep.mubr.bf16.mxu0 0
      %636 = vmatmul.mubr.bf16.gmra.mxu0 %v477
      %v637 = vpop.f32.mrf.mxu0
      %v638 = vadd.f32 0.0, %v637
      %v639 = vpop.f32.mrf.mxu0
      %v640 = vpop.f32.mrf.mxu0
      %v641 = vadd.f32 0.0, %v640
      %v642 = vpop.f32.mrf.mxu0
      %643 = vdwg.mxu0
      %v644 = vpack.c.bf16 %v521, %v518
      %v645 = vpack.c.bf16 %v529, %v526
      %v646 = vpack.c.bf16 %v537, %v534
      %v647 = vpack.c.bf16 %v545, %v542
      %v648 = vpack.c.bf16 %v553, %v550
      %v649 = vpack.c.bf16 %v561, %v558
      %v650 = vpack.c.bf16 %v569, %v566
      %v651 = vpack.c.bf16 %v577, %v574
      %v652 = vpack.c.bf16 %v585, %v582
      %v653 = vpack.c.bf16 %v593, %v590
      %v654 = vpack.c.bf16 %v601, %v598
      %v655 = vpack.c.bf16 %v609, %v606
      %v656 = vpack.c.bf16 %v617, %v614
      %v657 = vpack.c.bf16 %v625, %v622
      %v658 = vpack.c.bf16 %v633, %v630
      %v659 = vpack.c.bf16 %v641, %v638
      %v676 = vunpack.c.l.b16 %v644
      %v677 = vunpack.c.h.b16 %v644
      %v678 = vunpack.c.l.b16 %v645
      %v679 = vunpack.c.h.b16 %v645
      %v680 = vunpack.c.l.b16 %v646
      %v681 = vunpack.c.h.b16 %v646
      %v682 = vunpack.c.l.b16 %v647
      %v683 = vunpack.c.h.b16 %v647
      %v684 = vunpack.c.l.b16 %v648
      %v685 = vunpack.c.h.b16 %v648
      %v686 = vunpack.c.l.b16 %v649
      %v687 = vunpack.c.h.b16 %v649
      %v688 = vunpack.c.l.b16 %v650
      %v689 = vunpack.c.h.b16 %v650
      %v690 = vunpack.c.l.b16 %v651
      %v691 = vunpack.c.h.b16 %v651
      %v692 = vunpack.c.l.b16 %v652
      %v693 = vunpack.c.h.b16 %v652
      %v694 = vunpack.c.l.b16 %v653
      %v695 = vunpack.c.h.b16 %v653
      %v696 = vunpack.c.l.b16 %v654
      %v697 = vunpack.c.h.b16 %v654
      %v698 = vunpack.c.l.b16 %v655
      %v699 = vunpack.c.h.b16 %v655
      %v700 = vunpack.c.l.b16 %v656
      %v701 = vunpack.c.h.b16 %v656
      %v702 = vunpack.c.l.b16 %v657
      %v703 = vunpack.c.h.b16 %v657
      %v704 = vunpack.c.l.b16 %v658
      %v705 = vunpack.c.h.b16 %v658
      %v706 = vunpack.c.l.b16 %v659
      %v707 = vunpack.c.h.b16 %v659
      %v708 = vpack.c.b16 %v676, %v676
      %v709 = vpack.c.b16 %v677, %v677
      %v710 = vpack.c.b16 %v678, %v678
      %v711 = vpack.c.b16 %v679, %v679
      %v712 = vpack.c.b16 %v680, %v680
      %v713 = vpack.c.b16 %v681, %v681
      %v714 = vpack.c.b16 %v682, %v682
      %v715 = vpack.c.b16 %v683, %v683
      %v716 = vpack.c.b16 %v684, %v684
      %v717 = vpack.c.b16 %v685, %v685
      %v718 = vpack.c.b16 %v686, %v686
      %v719 = vpack.c.b16 %v687, %v687
      %v720 = vpack.c.b16 %v688, %v688
      %v721 = vpack.c.b16 %v689, %v689
      %v722 = vpack.c.b16 %v690, %v690
      %v723 = vpack.c.b16 %v691, %v691
      %v724 = vpack.c.b16 %v692, %v692
      %v725 = vpack.c.b16 %v693, %v693
      %v726 = vpack.c.b16 %v694, %v694
      %v727 = vpack.c.b16 %v695, %v695
      %v728 = vpack.c.b16 %v696, %v696
      %v729 = vpack.c.b16 %v697, %v697
      %v730 = vpack.c.b16 %v698, %v698
      %v731 = vpack.c.b16 %v699, %v699
      %v732 = vpack.c.b16 %v700, %v700
      %v733 = vpack.c.b16 %v701, %v701
      %v734 = vpack.c.b16 %v702, %v702
      %v735 = vpack.c.b16 %v703, %v703
      %v736 = vpack.c.b16 %v704, %v704
      %v737 = vpack.c.b16 %v705, %v705
      %v738 = vpack.c.b16 %v706, %v706
      %v739 = vpack.c.b16 %v707, %v707
      %772 = vst [vmem:[%s283] sm:$0xf] %v708
      %773 = vst [vmem:[%s283 + $0x4] sm:$0xf] %v709
      %774 = vst [vmem:[%s283 + $0x8] sm:$0xf] %v710
      %775 = vst [vmem:[%s283 + $0xc] sm:$0xf] %v711
      %776 = vst [vmem:[%s283 + $0x10] sm:$0xf] %v712
      %777 = vst [vmem:[%s283 + $0x14] sm:$0xf] %v713
      %778 = vst [vmem:[%s283 + $0x18] sm:$0xf] %v714
      %779 = vst [vmem:[%s283 + $0x1c] sm:$0xf] %v715
      %780 = vst [vmem:[%s283 + $0x20] sm:$0xf] %v716
      %781 = vst [vmem:[%s283 + $0x24] sm:$0xf] %v717
      %782 = vst [vmem:[%s283 + $0x28] sm:$0xf] %v718
      %783 = vst [vmem:[%s283 + $0x2c] sm:$0xf] %v719
      %784 = vst [vmem:[%s283 + $0x30] sm:$0xf] %v720
      %785 = vst [vmem:[%s283 + $0x34] sm:$0xf] %v721
      %786 = vst [vmem:[%s283 + $0x38] sm:$0xf] %v722
      %787 = vst [vmem:[%s283 + $0x3c] sm:$0xf] %v723
      %788 = vst [vmem:[%s283 + $0x40] sm:$0xf] %v724
      %789 = vst [vmem:[%s283 + $0x44] sm:$0xf] %v725
      %790 = vst [vmem:[%s283 + $0x48] sm:$0xf] %v726
      %791 = vst [vmem:[%s283 + $0x4c] sm:$0xf] %v727
      %792 = vst [vmem:[%s283 + $0x50] sm:$0xf] %v728
      %793 = vst [vmem:[%s283 + $0x54] sm:$0xf] %v729
      %794 = vst [vmem:[%s283 + $0x58] sm:$0xf] %v730
      %795 = vst [vmem:[%s283 + $0x5c] sm:$0xf] %v731
      %796 = vst [vmem:[%s283 + $0x60] sm:$0xf] %v732
      %797 = vst [vmem:[%s283 + $0x64] sm:$0xf] %v733
      %798 = vst [vmem:[%s283 + $0x68] sm:$0xf] %v734
      %799 = vst [vmem:[%s283 + $0x6c] sm:$0xf] %v735
      %800 = vst [vmem:[%s283 + $0x70] sm:$0xf] %v736
      %801 = vst [vmem:[%s283 + $0x74] sm:$0xf] %v737
      %802 = vst [vmem:[%s283 + $0x78] sm:$0xf] %v738
      %803 = vst [vmem:[%s283 + $0x7c] sm:$0xf] %v739
      %v804 = vld [vmem:[%s2] sm:$0xff]
      %v805 = vld [vmem:[%s2 + $0x8] sm:$0xff]
      %v806 = vld [vmem:[%s2 + $0x10] sm:$0xff]
      %v807 = vld [vmem:[%s2 + $0x18] sm:$0xff]
      %v808 = vld [vmem:[%s2 + $0x20] sm:$0xff]
      %v809 = vld [vmem:[%s2 + $0x28] sm:$0xff]
      %v810 = vld [vmem:[%s2 + $0x30] sm:$0xff]
      %v811 = vld [vmem:[%s2 + $0x38] sm:$0xff]
      %v812 = vld [vmem:[%s2 + $0x40] sm:$0xff]
      %v813 = vld [vmem:[%s2 + $0x48] sm:$0xff]
      %v814 = vld [vmem:[%s2 + $0x50] sm:$0xff]
      %v815 = vld [vmem:[%s2 + $0x58] sm:$0xff]
      %v816 = vld [vmem:[%s2 + $0x60] sm:$0xff]
      %v817 = vld [vmem:[%s2 + $0x68] sm:$0xff]
      %v818 = vld [vmem:[%s2 + $0x70] sm:$0xff]
      %v819 = vld [vmem:[%s2 + $0x78] sm:$0xff]
      %v820 = vld [vmem:[%s2 + $0x80] sm:$0xff]
      %v821 = vld [vmem:[%s2 + $0x88] sm:$0xff]
      %v822 = vld [vmem:[%s2 + $0x90] sm:$0xff]
      %v823 = vld [vmem:[%s2 + $0x98] sm:$0xff]
      %v824 = vld [vmem:[%s2 + $0xa0] sm:$0xff]
      %v825 = vld [vmem:[%s2 + $0xa8] sm:$0xff]
      %v826 = vld [vmem:[%s2 + $0xb0] sm:$0xff]
      %v827 = vld [vmem:[%s2 + $0xb8] sm:$0xff]
      %v828 = vld [vmem:[%s2 + $0xc0] sm:$0xff]
      %v829 = vld [vmem:[%s2 + $0xc8] sm:$0xff]
      %v830 = vld [vmem:[%s2 + $0xd0] sm:$0xff]
      %v831 = vld [vmem:[%s2 + $0xd8] sm:$0xff]
      %v832 = vld [vmem:[%s2 + $0xe0] sm:$0xff]
      %v833 = vld [vmem:[%s2 + $0xe8] sm:$0xff]
      %v834 = vld [vmem:[%s2 + $0xf0] sm:$0xff]
      %v835 = vld [vmem:[%s2 + $0xf8] sm:$0xff]
      %837 = vset.pattern.permute.xlu0 0
      %838 = vperm.xlu0 %837, %v804
      %v839 = vpop.permute.xlu0 %838
      %842 = vset.pattern.permute.xlu0 0
      %843 = vperm.xlu0 %842, %v805
      %v844 = vpop.permute.xlu0 %843
      %847 = vset.pattern.permute.xlu0 0
      %848 = vperm.xlu0 %847, %v806
      %v849 = vpop.permute.xlu0 %848
      %852 = vset.pattern.permute.xlu0 0
      %853 = vperm.xlu0 %852, %v807
      %v854 = vpop.permute.xlu0 %853
      %857 = vset.pattern.permute.xlu0 0
      %858 = vperm.xlu0 %857, %v808
      %v859 = vpop.permute.xlu0 %858
      %862 = vset.pattern.permute.xlu0 0
      %863 = vperm.xlu0 %862, %v809
      %v864 = vpop.permute.xlu0 %863
      %867 = vset.pattern.permute.xlu0 0
      %868 = vperm.xlu0 %867, %v810
      %v869 = vpop.permute.xlu0 %868
      %872 = vset.pattern.permute.xlu0 0
      %873 = vperm.xlu0 %872, %v811
      %v874 = vpop.permute.xlu0 %873
      %877 = vset.pattern.permute.xlu0 0
      %878 = vperm.xlu0 %877, %v812
      %v879 = vpop.permute.xlu0 %878
      %882 = vset.pattern.permute.xlu0 0
      %883 = vperm.xlu0 %882, %v813
      %v884 = vpop.permute.xlu0 %883
      %887 = vset.pattern.permute.xlu0 0
      %888 = vperm.xlu0 %887, %v814
      %v889 = vpop.permute.xlu0 %888
      %892 = vset.pattern.permute.xlu0 0
      %893 = vperm.xlu0 %892, %v815
      %v894 = vpop.permute.xlu0 %893
      %897 = vset.pattern.permute.xlu0 0
      %898 = vperm.xlu0 %897, %v816
      %v899 = vpop.permute.xlu0 %898
      %902 = vset.pattern.permute.xlu0 0
      %903 = vperm.xlu0 %902, %v817
      %v904 = vpop.permute.xlu0 %903
      %907 = vset.pattern.permute.xlu0 0
      %908 = vperm.xlu0 %907, %v818
      %v909 = vpop.permute.xlu0 %908
      %912 = vset.pattern.permute.xlu0 0
      %913 = vperm.xlu0 %912, %v819
      %v914 = vpop.permute.xlu0 %913
      %917 = vset.pattern.permute.xlu0 0
      %918 = vperm.xlu0 %917, %v820
      %v919 = vpop.permute.xlu0 %918
      %922 = vset.pattern.permute.xlu0 0
      %923 = vperm.xlu0 %922, %v821
      %v924 = vpop.permute.xlu0 %923
      %927 = vset.pattern.permute.xlu0 0
      %928 = vperm.xlu0 %927, %v822
      %v929 = vpop.permute.xlu0 %928
      %932 = vset.pattern.permute.xlu0 0
      %933 = vperm.xlu0 %932, %v823
      %v934 = vpop.permute.xlu0 %933
      %937 = vset.pattern.permute.xlu0 0
      %938 = vperm.xlu0 %937, %v824
      %v939 = vpop.permute.xlu0 %938
      %942 = vset.pattern.permute.xlu0 0
      %943 = vperm.xlu0 %942, %v825
      %v944 = vpop.permute.xlu0 %943
      %947 = vset.pattern.permute.xlu0 0
      %948 = vperm.xlu0 %947, %v826
      %v949 = vpop.permute.xlu0 %948
      %952 = vset.pattern.permute.xlu0 0
      %953 = vperm.xlu0 %952, %v827
      %v954 = vpop.permute.xlu0 %953
      %957 = vset.pattern.permute.xlu0 0
      %958 = vperm.xlu0 %957, %v828
      %v959 = vpop.permute.xlu0 %958
      %962 = vset.pattern.permute.xlu0 0
      %963 = vperm.xlu0 %962, %v829
      %v964 = vpop.permute.xlu0 %963
      %967 = vset.pattern.permute.xlu0 0
      %968 = vperm.xlu0 %967, %v830
      %v969 = vpop.permute.xlu0 %968
      %972 = vset.pattern.permute.xlu0 0
      %973 = vperm.xlu0 %972, %v831
      %v974 = vpop.permute.xlu0 %973
      %977 = vset.pattern.permute.xlu0 0
      %978 = vperm.xlu0 %977, %v832
      %v979 = vpop.permute.xlu0 %978
      %982 = vset.pattern.permute.xlu0 0
      %983 = vperm.xlu0 %982, %v833
      %v984 = vpop.permute.xlu0 %983
      %987 = vset.pattern.permute.xlu0 0
      %988 = vperm.xlu0 %987, %v834
      %v989 = vpop.permute.xlu0 %988
      %992 = vset.pattern.permute.xlu0 0
      %993 = vperm.xlu0 %992, %v835
      %v994 = vpop.permute.xlu0 %993
      %v996 = vmul.f32 %v518, %v839
      %v997 = vmul.f32 %v521, %v844
      %v998 = vmul.f32 %v526, %v849
      %v999 = vmul.f32 %v529, %v854
      %v1000 = vmul.f32 %v534, %v859
      %v1001 = vmul.f32 %v537, %v864
      %v1002 = vmul.f32 %v542, %v869
      %v1003 = vmul.f32 %v545, %v874
      %v1004 = vmul.f32 %v550, %v879
      %v1005 = vmul.f32 %v553, %v884
      %v1006 = vmul.f32 %v558, %v889
      %v1007 = vmul.f32 %v561, %v894
      %v1008 = vmul.f32 %v566, %v899
      %v1009 = vmul.f32 %v569, %v904
      %v1010 = vmul.f32 %v574, %v909
      %v1011 = vmul.f32 %v577, %v914
      %v1012 = vmul.f32 %v582, %v919
      %v1013 = vmul.f32 %v585, %v924
      %v1014 = vmul.f32 %v590, %v929
      %v1015 = vmul.f32 %v593, %v934
      %v1016 = vmul.f32 %v598, %v939
      %v1017 = vmul.f32 %v601, %v944
      %v1018 = vmul.f32 %v606, %v949
      %v1019 = vmul.f32 %v609, %v954
      %v1020 = vmul.f32 %v614, %v959
      %v1021 = vmul.f32 %v617, %v964
      %v1022 = vmul.f32 %v622, %v969
      %v1023 = vmul.f32 %v625, %v974
      %v1024 = vmul.f32 %v630, %v979
      %v1025 = vmul.f32 %v633, %v984
      %v1026 = vmul.f32 %v638, %v989
      %v1027 = vmul.f32 %v641, %v994
      %v1028 = vadd.f32 %v996, %v997
      %v1029 = vadd.f32 %v1028, %v998
      %v1030 = vadd.f32 %v1029, %v999
      %v1031 = vadd.f32 %v1030, %v1000
      %v1032 = vadd.f32 %v1031, %v1001
      %v1033 = vadd.f32 %v1032, %v1002
      %v1034 = vadd.f32 %v1033, %v1003
      %v1035 = vadd.f32 %v1034, %v1004
      %v1036 = vadd.f32 %v1035, %v1005
      %v1037 = vadd.f32 %v1036, %v1006
      %v1038 = vadd.f32 %v1037, %v1007
      %v1039 = vadd.f32 %v1038, %v1008
      %v1040 = vadd.f32 %v1039, %v1009
      %v1041 = vadd.f32 %v1040, %v1010
      %v1042 = vadd.f32 %v1041, %v1011
      %v1043 = vadd.f32 %v1042, %v1012
      %v1044 = vadd.f32 %v1043, %v1013
      %v1045 = vadd.f32 %v1044, %v1014
      %v1046 = vadd.f32 %v1045, %v1015
      %v1047 = vadd.f32 %v1046, %v1016
      %v1048 = vadd.f32 %v1047, %v1017
      %v1049 = vadd.f32 %v1048, %v1018
      %v1050 = vadd.f32 %v1049, %v1019
      %v1051 = vadd.f32 %v1050, %v1020
      %v1052 = vadd.f32 %v1051, %v1021
      %v1053 = vadd.f32 %v1052, %v1022
      %v1054 = vadd.f32 %v1053, %v1023
      %v1055 = vadd.f32 %v1054, %v1024
      %v1056 = vadd.f32 %v1055, %v1025
      %v1057 = vadd.f32 %v1056, %v1026
      %v1058 = vadd.f32 %v1057, %v1027
      %v1059 = vrot.slane %v1058, 4
      %v1060 = vadd.f32 %v1058, %v1059
      %v1061 = vrot.slane %v1060, 2
      %v1062 = vadd.f32 %v1060, %v1061
      %v1063 = vrot.slane %v1062, 1
      %v1064 = vadd.f32 %v1062, %v1063
      %1065 = vst [vmem:[%s290] sm:$0x1] %v1064
      %v1066 = vmul.f32 %v996, %v518
      %v1067 = vmul.f32 %v997, %v521
      %v1068 = vmul.f32 %v998, %v526
      %v1069 = vmul.f32 %v999, %v529
      %v1070 = vmul.f32 %v1000, %v534
      %v1071 = vmul.f32 %v1001, %v537
      %v1072 = vmul.f32 %v1002, %v542
      %v1073 = vmul.f32 %v1003, %v545
      %v1074 = vmul.f32 %v1004, %v550
      %v1075 = vmul.f32 %v1005, %v553
      %v1076 = vmul.f32 %v1006, %v558
      %v1077 = vmul.f32 %v1007, %v561
      %v1078 = vmul.f32 %v1008, %v566
      %v1079 = vmul.f32 %v1009, %v569
      %v1080 = vmul.f32 %v1010, %v574
      %v1081 = vmul.f32 %v1011, %v577
      %v1082 = vmul.f32 %v1012, %v582
      %v1083 = vmul.f32 %v1013, %v585
      %v1084 = vmul.f32 %v1014, %v590
      %v1085 = vmul.f32 %v1015, %v593
      %v1086 = vmul.f32 %v1016, %v598
      %v1087 = vmul.f32 %v1017, %v601
      %v1088 = vmul.f32 %v1018, %v606
      %v1089 = vmul.f32 %v1019, %v609
      %v1090 = vmul.f32 %v1020, %v614
      %v1091 = vmul.f32 %v1021, %v617
      %v1092 = vmul.f32 %v1022, %v622
      %v1093 = vmul.f32 %v1023, %v625
      %v1094 = vmul.f32 %v1024, %v630
      %v1095 = vmul.f32 %v1025, %v633
      %v1096 = vmul.f32 %v1026, %v638
      %v1097 = vmul.f32 %v1027, %v641
      %v1098 = vadd.f32 %v1066, %v1067
      %v1099 = vadd.f32 %v1098, %v1068
      %v1100 = vadd.f32 %v1099, %v1069
      %v1101 = vadd.f32 %v1100, %v1070
      %v1102 = vadd.f32 %v1101, %v1071
      %v1103 = vadd.f32 %v1102, %v1072
      %v1104 = vadd.f32 %v1103, %v1073
      %v1105 = vadd.f32 %v1104, %v1074
      %v1106 = vadd.f32 %v1105, %v1075
      %v1107 = vadd.f32 %v1106, %v1076
      %v1108 = vadd.f32 %v1107, %v1077
      %v1109 = vadd.f32 %v1108, %v1078
      %v1110 = vadd.f32 %v1109, %v1079
      %v1111 = vadd.f32 %v1110, %v1080
      %v1112 = vadd.f32 %v1111, %v1081
      %v1113 = vadd.f32 %v1112, %v1082
      %v1114 = vadd.f32 %v1113, %v1083
      %v1115 = vadd.f32 %v1114, %v1084
      %v1116 = vadd.f32 %v1115, %v1085
      %v1117 = vadd.f32 %v1116, %v1086
      %v1118 = vadd.f32 %v1117, %v1087
      %v1119 = vadd.f32 %v1118, %v1088
      %v1120 = vadd.f32 %v1119, %v1089
      %v1121 = vadd.f32 %v1120, %v1090
      %v1122 = vadd.f32 %v1121, %v1091
      %v1123 = vadd.f32 %v1122, %v1092
      %v1124 = vadd.f32 %v1123, %v1093
      %v1125 = vadd.f32 %v1124, %v1094
      %v1126 = vadd.f32 %v1125, %v1095
      %v1127 = vadd.f32 %v1126, %v1096
      %v1128 = vadd.f32 %v1127, %v1097
      %v1129 = vrot.slane %v1128, 4
      %v1130 = vadd.f32 %v1128, %v1129
      %v1131 = vrot.slane %v1130, 2
      %v1132 = vadd.f32 %v1130, %v1131
      %v1133 = vrot.slane %v1132, 1
      %v1134 = vadd.f32 %v1132, %v1133
      %1135 = vst [vmem:[%s296] sm:$0x1] %v1134
      %s1136 = smul.u32 32, %s22
      %p1137 = scmp.lt.s32.totalorder %s21, 1
      %s1138 = scalar_select %p1137, %s21, 1
      %p1139 = scmp.lt.s32.totalorder %s1136, 31
      %s1140 = scalar_select %p1139, %s1136, 31
      %s1141 = smul.addr %s1138, 32
      %s1142 = sadd.s32 %s1140, %s1141
      %s1143 = smul.addr %s1142, 4
      %s1144 = scalar_lea.vmem %s3, %s1143
      %p1145 = scmp.lt.s32.totalorder %s21, 1
      %s1146 = scalar_select %p1145, %s21, 1
      %p1147 = scmp.lt.s32.totalorder %s22, 0
      %s1148 = scalar_select %p1147, %s22, 0
      %s1149 = sadd.s32 %s1148, %s1146
      %s1150 = scalar_lea.vmem %s4, %s1149
      %p1151 = scmp.lt.s32.totalorder %s21, 1
      %s1152 = scalar_select %p1151, %s21, 1
      %p1153 = scmp.lt.s32.totalorder %s22, 0
      %s1154 = scalar_select %p1153, %s22, 0
      %s1155 = sadd.s32 %s1154, %s1152
      %s1156 = scalar_lea.vmem %s5, %s1155
      // Predicated region
      $region33: #{conv_layer_forward.2} parent=31 // pred_check
        %p1157 = pneg %p119
      $region34: #{conv_layer_forward.2} parent=31 // pred_check_branch
        %1159 = sbr.rel (%p1157) target = $region36
      $region35: #{conv_layer_forward.2} parent=31 // pred_region
        %s1160 = smul.u32 32, %s22
      $region36: #{conv_layer_forward.2} parent=31 // pred_fallthru
        _
      // Predicated region
      $region37: #{conv_layer_forward.2} parent=31 // pred_check
        %p1161 = pneg %p147
      $region38: #{conv_layer_forward.2} parent=31 // pred_check_branch
        %1163 = sbr.rel (%p1161) target = $region40
      $region39: #{conv_layer_forward.2} parent=31 // pred_region
        _
      $region40: #{conv_layer_forward.2} parent=31 // pred_fallthru
        _
      // Predicated region
      $region41: #{conv_layer_forward.2} parent=31 // pred_check
        %p1164 = pneg %p175
      $region42: #{conv_layer_forward.2} parent=31 // pred_check_branch
        %1166 = sbr.rel (%p1164) target = $region44
      $region43: #{conv_layer_forward.2} parent=31 // pred_region
        _
      $region44: #{conv_layer_forward.2} parent=31 // pred_fallthru
        _
    $region32: #{conv_layer_forward.2} parent=5 // pred_fallthru
      _
    %p1167 = scmp.le.s32.totalorder 2, %s12
    // Predicated region
    $region45: #{conv_layer_forward.2} parent=5 // pred_check
      %p1168 = pneg %p1167
    $region46: #{conv_layer_forward.2} parent=5 // pred_check_branch
      %1170 = sbr.rel (%p1168) target = $region48
    $region47: #{conv_layer_forward.2} parent=5 // pred_region
      %s1171 = ssub.s32 %s12, 2
      // Predicated region
      $region49: #{conv_layer_forward.2} parent=47 // pred_check
        %p1172 = pneg %p125
      $region50: #{conv_layer_forward.2} parent=47 // pred_check_branch
        %1174 = sbr.rel (%p1172) target = $region52
      $region51: #{conv_layer_forward.2} parent=47 // pred_region
        %s1175 = smul.u32 32, %s24
        %p1176 = scmp.lt.s32.totalorder %s23, 1
        %s1177 = scalar_select %p1176, %s23, 1
        %p1178 = scmp.lt.s32.totalorder %s1175, 31
        %s1179 = scalar_select %p1178, %s1175, 31
        %s1180 = smul.addr %s1177, 32
        %s1181 = sadd.s32 %s1179, %s1180
        %s1182 = smul.addr %s1181, 4
        %s1183 = scalar_lea.vmem %s3, %s1182
      $region52: #{conv_layer_forward.2} parent=47 // pred_fallthru
        _
      // Predicated region
      $region53: #{conv_layer_forward.2} parent=47 // pred_check
        %p1184 = pneg %p153
      $region54: #{conv_layer_forward.2} parent=47 // pred_check_branch
        %1186 = sbr.rel (%p1184) target = $region56
      $region55: #{conv_layer_forward.2} parent=47 // pred_region
        %p1187 = scmp.lt.s32.totalorder %s23, 1
        %s1188 = scalar_select %p1187, %s23, 1
        %p1189 = scmp.lt.s32.totalorder %s24, 0
        %s1190 = scalar_select %p1189, %s24, 0
        %s1191 = sadd.s32 %s1190, %s1188
        %s1192 = scalar_lea.vmem %s4, %s1191
      $region56: #{conv_layer_forward.2} parent=47 // pred_fallthru
        _
      // Predicated region
      $region57: #{conv_layer_forward.2} parent=47 // pred_check
        %p1193 = pneg %p181
      $region58: #{conv_layer_forward.2} parent=47 // pred_check_branch
        %1195 = sbr.rel (%p1193) target = $region60
      $region59: #{conv_layer_forward.2} parent=47 // pred_region
        %p1196 = scmp.lt.s32.totalorder %s23, 1
        %s1197 = scalar_select %p1196, %s23, 1
        %p1198 = scmp.lt.s32.totalorder %s24, 0
        %s1199 = scalar_select %p1198, %s24, 0
        %s1200 = sadd.s32 %s1199, %s1197
        %s1201 = scalar_lea.vmem %s5, %s1200
      $region60: #{conv_layer_forward.2} parent=47 // pred_fallthru
        _
    $region48: #{conv_layer_forward.2} parent=5 // pred_fallthru
      _
  $region6: #{conv_layer_forward.2} parent=0 // loop_footer
    %s16 = sadd.s32 1, %s12
  $region7: #{conv_layer_forward.2} parent=0 // loop_footer_branch
    %11 = sbr.rel target = $region3
  $region8: #{conv_layer_forward.2} parent=0 // loop_exit
    _

</llo_original>
